<compile_context>
chip_gen: v7x
topology: tpu7x:2x2x1
jax: 0.10.0
libtpu: 0.0.40
codegen_flags: <defaults>
</compile_context>

<pallas_src>
import jax
import jax.numpy as jnp
import numpy as np
from jax.experimental import pallas as pl
from jax.experimental.pallas import tpu as pltpu

NOISE_DIM = 100
LABEL_DIM = 10
HIDDEN = 240
OUT_FEATURES = 784
MAX_BATCH_TILE = 512


def _gen_kernel(z_ref, y_ref,
                w1z_ref, w1y_ref, b1_ref,
                w2_ref, b2_ref,
                w3_ref, b3_ref,
                w4_ref, b4_ref,
                o_ref):
    z = z_ref[...]   # (TB, noise_dim)  bf16
    y = y_ref[...]   # (TB, label_dim)  bf16

    # ---- Linear(noise+label -> 240) + ReLU ----  (split-weight sum == concat)
    h = (jnp.dot(z, w1z_ref[...], preferred_element_type=jnp.float32)
         + jnp.dot(y, w1y_ref[...], preferred_element_type=jnp.float32)
         + b1_ref[...])
    h = jnp.maximum(h, 0.0)
    # TODO(synk): Dropout(0.5) implemented as eval-mode identity (no stochastic mask).

    # ---- Linear(240 -> 240) + ReLU ----
    h = jnp.dot(h.astype(jnp.bfloat16), w2_ref[...],
                preferred_element_type=jnp.float32) + b2_ref[...]
    h = jnp.maximum(h, 0.0)

    # ---- Linear(240 -> 240) + ReLU ----
    h = jnp.dot(h.astype(jnp.bfloat16), w3_ref[...],
                preferred_element_type=jnp.float32) + b3_ref[...]
    h = jnp.maximum(h, 0.0)

    # ---- Linear(240 -> 784) + Sigmoid ----
    h = jnp.dot(h.astype(jnp.bfloat16), w4_ref[...],
                preferred_element_type=jnp.float32) + b4_ref[...]
    o_ref[...] = jax.nn.sigmoid(h).astype(o_ref.dtype)


def prepare_params(params, noise_dim=NOISE_DIM):
    """One-time parameter preprocessing (split w1, cast to bf16, reshape biases)."""
    w1, b1, w2, b2, w3, b3, w4, b4 = params
    return (
        w1[:noise_dim].astype(jnp.bfloat16),          # w1z (noise_dim, 240)
        w1[noise_dim:].astype(jnp.bfloat16),          # w1y (label_dim, 240)
        b1.reshape(1, -1).astype(jnp.float32),
        w2.astype(jnp.bfloat16), b2.reshape(1, -1).astype(jnp.float32),
        w3.astype(jnp.bfloat16), b3.reshape(1, -1).astype(jnp.float32),
        w4.astype(jnp.bfloat16), b4.reshape(1, -1).astype(jnp.float32),
    )


def _choose_tile(b):
    if b >= MAX_BATCH_TILE:
        return MAX_BATCH_TILE
    return max(8, ((b + 7) // 8) * 8)   # pad small batches to a sublane multiple


def generator_forward(noise, labels, prepped, *, tile=None):
    """noise: (B, noise_dim) (any trailing shape, flattened); labels: (B, label_dim)."""
    B = noise.shape[0]
    z = noise.reshape(B, -1).astype(jnp.bfloat16)
    y = labels.astype(jnp.bfloat16)
    nd, ld = z.shape[1], y.shape[1]

    tb = tile if tile is not None else _choose_tile(B)
    n_tiles = pl.cdiv(B, tb)
    B_pad = n_tiles * tb
    if B_pad != B:
        z = jnp.pad(z, ((0, B_pad - B), (0, 0)))
        y = jnp.pad(y, ((0, B_pad - B), (0, 0)))

    w1z, w1y, b1, w2, b2, w3, b3, w4, b4 = prepped

    batch_map = lambda i: (i, 0)
    const_map = lambda i: (0, 0)

    flops = 2 * B_pad * (nd * HIDDEN + ld * HIDDEN
                         + 2 * HIDDEN * HIDDEN + HIDDEN * OUT_FEATURES)
    weight_bytes = 2 * (nd * HIDDEN + ld * HIDDEN
                        + 2 * HIDDEN * HIDDEN + HIDDEN * OUT_FEATURES) \
        + 4 * (3 * HIDDEN + OUT_FEATURES)
    bytes_accessed = B_pad * (nd + ld) * 2 + B_pad * OUT_FEATURES * 4 + weight_bytes

    out = pl.pallas_call(
        _gen_kernel,
        out_shape=jax.ShapeDtypeStruct((B_pad, OUT_FEATURES), jnp.float32),
        grid=(n_tiles,),
        in_specs=[
            pl.BlockSpec((tb, nd), batch_map),           # noise tile
            pl.BlockSpec((tb, ld), batch_map),           # label tile
            pl.BlockSpec((nd, HIDDEN), const_map),       # w1 (noise part)
            pl.BlockSpec((ld, HIDDEN), const_map),       # w1 (label part)
            pl.BlockSpec((1, HIDDEN), const_map),        # b1
            pl.BlockSpec((HIDDEN, HIDDEN), const_map),   # w2
            pl.BlockSpec((1, HIDDEN), const_map),        # b2
            pl.BlockSpec((HIDDEN, HIDDEN), const_map),   # w3
            pl.BlockSpec((1, HIDDEN), const_map),        # b3
            pl.BlockSpec((HIDDEN, OUT_FEATURES), const_map),  # w4
            pl.BlockSpec((1, OUT_FEATURES), const_map),       # b4
        ],
        out_specs=pl.BlockSpec((tb, OUT_FEATURES), batch_map),
        compiler_params=pltpu.CompilerParams(
            dimension_semantics=("parallel",),
            vmem_limit_bytes=64 * 1024 * 1024,
        ),
        cost_estimate=pl.CostEstimate(
            flops=flops,
            transcendentals=B_pad * OUT_FEATURES,
            bytes_accessed=bytes_accessed,
        ),
    )(z, y, w1z, w1y, b1, w2, b2, w3, b3, w4, b4)

    return out[:B]


def reference_forward(noise, labels, params):
    """Plain-JAX f32 replica of the PyTorch module (eval mode) for validation."""
    w1, b1, w2, b2, w3, b3, w4, b4 = params
    B = noise.shape[0]
    x = jnp.concatenate([noise.reshape(B, -1), labels], axis=1).astype(jnp.float32)
    h = jnp.maximum(x @ w1 + b1, 0.0)
    h = jnp.maximum(h @ w2 + b2, 0.0)
    h = jnp.maximum(h @ w3 + b3, 0.0)
    return jax.nn.sigmoid(h @ w4 + b4)


def init_params(key):
    # Weights stored as (in_features, out_features); y = x @ W + b
    # (equivalent to PyTorch nn.Linear with W_torch = W.T).
    ks = jax.random.split(key, 8)
    w1 = jax.random.normal(ks[0], (NOISE_DIM + LABEL_DIM, HIDDEN), jnp.float32) * 0.05
    b1 = jax.random.normal(ks[1], (HIDDEN,), jnp.float32) * 0.05
    w2 = jax.random.normal(ks[2], (HIDDEN, HIDDEN), jnp.float32) * 0.05
    b2 = jax.random.normal(ks[3], (HIDDEN,), jnp.float32) * 0.05
    w3 = jax.random.normal(ks[4], (HIDDEN, HIDDEN), jnp.float32) * 0.05
    b3 = jax.random.normal(ks[5], (HIDDEN,), jnp.float32) * 0.05
    w4 = jax.random.normal(ks[6], (HIDDEN, OUT_FEATURES), jnp.float32) * 0.05
    b4 = jax.random.normal(ks[7], (OUT_FEATURES,), jnp.float32) * 0.05
    return (w1, b1, w2, b2, w3, b3, w4, b4)


if __name__ == "__main__":
    key = jax.random.PRNGKey(0)
    kp, kz, kl, kz2, kl2 = jax.random.split(key, 5)

    params = init_params(kp)
    prepped = prepare_params(params)

    # Small-batch check (B=2, padded to one 8-row tile).
    B = 2
    noise = jax.random.normal(kz, (B, NOISE_DIM), jnp.float32)
    labels = jax.nn.one_hot(
        jax.random.randint(kl, (B,), 0, LABEL_DIM), LABEL_DIM).astype(jnp.float32)
    out = jax.block_until_ready(generator_forward(noise, labels, prepped))
    ref = reference_forward(noise, labels, params)
    np.testing.assert_allclose(np.asarray(out), np.asarray(ref),
                               rtol=2e-2, atol=2e-2)

    # Multi-tile + remainder check (B=520 -> tile 512, 2 grid steps, padded tail).
    B2 = 520
    noise2 = jax.random.normal(kz2, (B2, NOISE_DIM), jnp.float32)
    labels2 = jax.nn.one_hot(
        jax.random.randint(kl2, (B2,), 0, LABEL_DIM), LABEL_DIM).astype(jnp.float32)
    out2 = jax.block_until_ready(generator_forward(noise2, labels2, prepped))
    ref2 = reference_forward(noise2, labels2, params)
    np.testing.assert_allclose(np.asarray(out2), np.asarray(ref2),
                               rtol=2e-2, atol=2e-2)

    print("KERNEL_OK")
</pallas_src>

<mosaic_0001>
module attributes {stable_mosaic.version = 11 : i64} {
  func.func @_gen_kernel(%arg0: i32, %arg1: memref<8x100xbf16, #tpu.memory_space<vmem>>, %arg2: memref<8x10xbf16, #tpu.memory_space<vmem>>, %arg3: memref<100x240xbf16, #tpu.memory_space<vmem>>, %arg4: memref<10x240xbf16, #tpu.memory_space<vmem>>, %arg5: memref<1x240xf32, #tpu.memory_space<vmem>>, %arg6: memref<240x240xbf16, #tpu.memory_space<vmem>>, %arg7: memref<1x240xf32, #tpu.memory_space<vmem>>, %arg8: memref<240x240xbf16, #tpu.memory_space<vmem>>, %arg9: memref<1x240xf32, #tpu.memory_space<vmem>>, %arg10: memref<240x784xbf16, #tpu.memory_space<vmem>>, %arg11: memref<1x784xf32, #tpu.memory_space<vmem>>, %arg12: memref<8x784xf32, #tpu.memory_space<vmem>>) attributes {dimension_semantics = [#tpu.dimension_semantics<parallel>], iteration_bounds = array<i64: 1>, scalar_prefetch = 0 : i64, scratch_operands = 0 : i64, tpu.core_type = #tpu.core_type<tc>, window_params = [{transform_indices = @transform_0, window_bounds = array<i64: 8, 100>}, {transform_indices = @transform_1, window_bounds = array<i64: 8, 10>}, {pipeline_mode = #tpu.pipeline_mode<synchronous>, transform_indices = @transform_2, window_bounds = array<i64: 100, 240>}, {pipeline_mode = #tpu.pipeline_mode<synchronous>, transform_indices = @transform_3, window_bounds = array<i64: 10, 240>}, {pipeline_mode = #tpu.pipeline_mode<synchronous>, transform_indices = @transform_4, window_bounds = array<i64: 1, 240>}, {pipeline_mode = #tpu.pipeline_mode<synchronous>, transform_indices = @transform_5, window_bounds = array<i64: 240, 240>}, {pipeline_mode = #tpu.pipeline_mode<synchronous>, transform_indices = @transform_6, window_bounds = array<i64: 1, 240>}, {pipeline_mode = #tpu.pipeline_mode<synchronous>, transform_indices = @transform_7, window_bounds = array<i64: 240, 240>}, {pipeline_mode = #tpu.pipeline_mode<synchronous>, transform_indices = @transform_8, window_bounds = array<i64: 1, 240>}, {pipeline_mode = #tpu.pipeline_mode<synchronous>, transform_indices = @transform_9, window_bounds = array<i64: 240, 784>}, {pipeline_mode = #tpu.pipeline_mode<synchronous>, transform_indices = @transform_10, window_bounds = array<i64: 1, 784>}, {transform_indices = @transform_11, window_bounds = array<i64: 8, 784>}]} {
    %c0 = arith.constant 0 : index
    %c0_0 = arith.constant 0 : index
    %0 = vector.load %arg1[%c0, %c0_0] : memref<8x100xbf16, #tpu.memory_space<vmem>>, vector<8x100xbf16>
    %c0_1 = arith.constant 0 : index
    %c0_2 = arith.constant 0 : index
    %1 = vector.load %arg2[%c0_1, %c0_2] : memref<8x10xbf16, #tpu.memory_space<vmem>>, vector<8x10xbf16>
    %c0_3 = arith.constant 0 : index
    %c0_4 = arith.constant 0 : index
    %2 = vector.load %arg3[%c0_3, %c0_4] : memref<100x240xbf16, #tpu.memory_space<vmem>>, vector<100x240xbf16>
    %cst = arith.constant dense<0.000000e+00> : vector<8x240xf32>
    %3 = tpu.matmul %0, %2, %cst {dimension_numbers = #tpu.dot_dimension_numbers<[1], [0], [0], [1], [0, 0, 1, 1], [], []>} : vector<8x100xbf16>, vector<100x240xbf16>, vector<8x240xf32> -> vector<8x240xf32>
    %c0_5 = arith.constant 0 : index
    %c0_6 = arith.constant 0 : index
    %4 = vector.load %arg4[%c0_5, %c0_6] : memref<10x240xbf16, #tpu.memory_space<vmem>>, vector<10x240xbf16>
    %cst_7 = arith.constant dense<0.000000e+00> : vector<8x240xf32>
    %5 = tpu.matmul %1, %4, %cst_7 {dimension_numbers = #tpu.dot_dimension_numbers<[1], [0], [0], [1], [0, 0, 1, 1], [], []>} : vector<8x10xbf16>, vector<10x240xbf16>, vector<8x240xf32> -> vector<8x240xf32>
    %6 = arith.addf %3, %5 : vector<8x240xf32>
    %c0_8 = arith.constant 0 : index
    %c0_9 = arith.constant 0 : index
    %7 = vector.load %arg5[%c0_8, %c0_9] : memref<1x240xf32, #tpu.memory_space<vmem>>, vector<1x240xf32>
    %8 = vector.broadcast %7 : vector<1x240xf32> to vector<8x240xf32>
    %9 = arith.addf %6, %8 : vector<8x240xf32>
    %cst_10 = arith.constant 0.000000e+00 : f32
    %10 = vector.broadcast %cst_10 : f32 to vector<8x240xf32>
    %11 = arith.maximumf %9, %10 : vector<8x240xf32>
    %12 = arith.truncf %11 : vector<8x240xf32> to vector<8x240xbf16>
    %c0_11 = arith.constant 0 : index
    %c0_12 = arith.constant 0 : index
    %13 = vector.load %arg6[%c0_11, %c0_12] : memref<240x240xbf16, #tpu.memory_space<vmem>>, vector<240x240xbf16>
    %cst_13 = arith.constant dense<0.000000e+00> : vector<8x240xf32>
    %14 = tpu.matmul %12, %13, %cst_13 {dimension_numbers = #tpu.dot_dimension_numbers<[1], [0], [0], [1], [0, 0, 1, 1], [], []>} : vector<8x240xbf16>, vector<240x240xbf16>, vector<8x240xf32> -> vector<8x240xf32>
    %c0_14 = arith.constant 0 : index
    %c0_15 = arith.constant 0 : index
    %15 = vector.load %arg7[%c0_14, %c0_15] : memref<1x240xf32, #tpu.memory_space<vmem>>, vector<1x240xf32>
    %16 = vector.broadcast %15 : vector<1x240xf32> to vector<8x240xf32>
    %17 = arith.addf %14, %16 : vector<8x240xf32>
    %cst_16 = arith.constant 0.000000e+00 : f32
    %18 = vector.broadcast %cst_16 : f32 to vector<8x240xf32>
    %19 = arith.maximumf %17, %18 : vector<8x240xf32>
    %20 = arith.truncf %19 : vector<8x240xf32> to vector<8x240xbf16>
    %c0_17 = arith.constant 0 : index
    %c0_18 = arith.constant 0 : index
    %21 = vector.load %arg8[%c0_17, %c0_18] : memref<240x240xbf16, #tpu.memory_space<vmem>>, vector<240x240xbf16>
    %cst_19 = arith.constant dense<0.000000e+00> : vector<8x240xf32>
    %22 = tpu.matmul %20, %21, %cst_19 {dimension_numbers = #tpu.dot_dimension_numbers<[1], [0], [0], [1], [0, 0, 1, 1], [], []>} : vector<8x240xbf16>, vector<240x240xbf16>, vector<8x240xf32> -> vector<8x240xf32>
    %c0_20 = arith.constant 0 : index
    %c0_21 = arith.constant 0 : index
    %23 = vector.load %arg9[%c0_20, %c0_21] : memref<1x240xf32, #tpu.memory_space<vmem>>, vector<1x240xf32>
    %24 = vector.broadcast %23 : vector<1x240xf32> to vector<8x240xf32>
    %25 = arith.addf %22, %24 : vector<8x240xf32>
    %cst_22 = arith.constant 0.000000e+00 : f32
    %26 = vector.broadcast %cst_22 : f32 to vector<8x240xf32>
    %27 = arith.maximumf %25, %26 : vector<8x240xf32>
    %28 = arith.truncf %27 : vector<8x240xf32> to vector<8x240xbf16>
    %c0_23 = arith.constant 0 : index
    %c0_24 = arith.constant 0 : index
    %29 = vector.load %arg10[%c0_23, %c0_24] : memref<240x784xbf16, #tpu.memory_space<vmem>>, vector<240x784xbf16>
    %cst_25 = arith.constant dense<0.000000e+00> : vector<8x784xf32>
    %30 = tpu.matmul %28, %29, %cst_25 {dimension_numbers = #tpu.dot_dimension_numbers<[1], [0], [0], [1], [0, 0, 1, 1], [], []>} : vector<8x240xbf16>, vector<240x784xbf16>, vector<8x784xf32> -> vector<8x784xf32>
    %c0_26 = arith.constant 0 : index
    %c0_27 = arith.constant 0 : index
    %31 = vector.load %arg11[%c0_26, %c0_27] : memref<1x784xf32, #tpu.memory_space<vmem>>, vector<1x784xf32>
    %32 = vector.broadcast %31 : vector<1x784xf32> to vector<8x784xf32>
    %33 = arith.addf %30, %32 : vector<8x784xf32>
    %34 = arith.negf %33 : vector<8x784xf32>
    %35 = math.exp %34 : vector<8x784xf32>
    %cst_28 = arith.constant 1.000000e+00 : f32
    %36 = vector.broadcast %cst_28 : f32 to vector<8x784xf32>
    %37 = arith.addf %36, %35 : vector<8x784xf32>
    %38 = arith.divf %36, %37 : vector<8x784xf32>
    %c0_29 = arith.constant 0 : index
    %c0_30 = arith.constant 0 : index
    %39 = vector.load %arg12[%c0_29, %c0_30] : memref<8x784xf32, #tpu.memory_space<vmem>>, vector<8x784xf32>
    tpu.vector_store %arg12[%c0_29, %c0_30], %38 {strides = array<i32>} : memref<8x784xf32, #tpu.memory_space<vmem>>, vector<8x784xf32>,
    return
  }
  func.func @transform_0(%arg0: i32) -> (i32, i32) {
    %c0_i32 = arith.constant 0 : i32
    %c0_i32_0 = arith.constant 0 : i32
    return %arg0, %c0_i32 : i32, i32
  }
  func.func @transform_1(%arg0: i32) -> (i32, i32) {
    %c0_i32 = arith.constant 0 : i32
    %c0_i32_0 = arith.constant 0 : i32
    return %arg0, %c0_i32 : i32, i32
  }
  func.func @transform_2(%arg0: i32) -> (i32, i32) {
    %c0_i32 = arith.constant 0 : i32
    %c0_i32_0 = arith.constant 0 : i32
    %c0_i32_1 = arith.constant 0 : i32
    return %c0_i32, %c0_i32_0 : i32, i32
  }
  func.func @transform_3(%arg0: i32) -> (i32, i32) {
    %c0_i32 = arith.constant 0 : i32
    %c0_i32_0 = arith.constant 0 : i32
    %c0_i32_1 = arith.constant 0 : i32
    return %c0_i32, %c0_i32_0 : i32, i32
  }
  func.func @transform_4(%arg0: i32) -> (i32, i32) {
    %c0_i32 = arith.constant 0 : i32
    %c0_i32_0 = arith.constant 0 : i32
    %c0_i32_1 = arith.constant 0 : i32
    return %c0_i32, %c0_i32_0 : i32, i32
  }
  func.func @transform_5(%arg0: i32) -> (i32, i32) {
    %c0_i32 = arith.constant 0 : i32
    %c0_i32_0 = arith.constant 0 : i32
    %c0_i32_1 = arith.constant 0 : i32
    return %c0_i32, %c0_i32_0 : i32, i32
  }
  func.func @transform_6(%arg0: i32) -> (i32, i32) {
    %c0_i32 = arith.constant 0 : i32
    %c0_i32_0 = arith.constant 0 : i32
    %c0_i32_1 = arith.constant 0 : i32
    return %c0_i32, %c0_i32_0 : i32, i32
  }
  func.func @transform_7(%arg0: i32) -> (i32, i32) {
    %c0_i32 = arith.constant 0 : i32
    %c0_i32_0 = arith.constant 0 : i32
    %c0_i32_1 = arith.constant 0 : i32
    return %c0_i32, %c0_i32_0 : i32, i32
  }
  func.func @transform_8(%arg0: i32) -> (i32, i32) {
    %c0_i32 = arith.constant 0 : i32
    %c0_i32_0 = arith.constant 0 : i32
    %c0_i32_1 = arith.constant 0 : i32
    return %c0_i32, %c0_i32_0 : i32, i32
  }
  func.func @transform_9(%arg0: i32) -> (i32, i32) {
    %c0_i32 = arith.constant 0 : i32
    %c0_i32_0 = arith.constant 0 : i32
    %c0_i32_1 = arith.constant 0 : i32
    return %c0_i32, %c0_i32_0 : i32, i32
  }
  func.func @transform_10(%arg0: i32) -> (i32, i32) {
    %c0_i32 = arith.constant 0 : i32
    %c0_i32_0 = arith.constant 0 : i32
    %c0_i32_1 = arith.constant 0 : i32
    return %c0_i32, %c0_i32_0 : i32, i32
  }
  func.func @transform_11(%arg0: i32) -> (i32, i32) {
    %c0_i32 = arith.constant 0 : i32
    %c0_i32_0 = arith.constant 0 : i32
    return %arg0, %c0_i32 : i32, i32
  }
}

</mosaic_0001>

<llo_original>
// kernel: tpu_custom_call.1
$region0: #{tpu_custom_call.1}
  #allocation0 [shape = 'u32[]', space=smem, size = 0x4, offset = 0x4, fixed_abs, tag = 'smem constant byte address 0x4 - core index']
  #allocation1 [shape = 'u32[144,128]{1,0:T(1,128)}', space=vmem, size = 0x12000, scoped, tag = 'internal scratch']
  %s0 = inlined_call_operand.hbm [shape: bf16[8,100], index: 0, kind: input, shape index: {}]
  %s1 = inlined_call_operand.hbm [shape: bf16[8,10], index: 1, kind: input, shape index: {}]
  %s2 = inlined_call_operand.hbm [shape: bf16[100,240], index: 2, kind: input, shape index: {}]
  %s3 = inlined_call_operand.hbm [shape: bf16[10,240], index: 3, kind: input, shape index: {}]
  %s4 = inlined_call_operand.hbm [shape: f32[1,240], index: 4, kind: input, shape index: {}]
  %s5 = inlined_call_operand.hbm [shape: bf16[240,240], index: 5, kind: input, shape index: {}]
  %s6 = inlined_call_operand.hbm [shape: f32[1,240], index: 6, kind: input, shape index: {}]
  %s7 = inlined_call_operand.hbm [shape: bf16[240,240], index: 7, kind: input, shape index: {}]
  %s8 = inlined_call_operand.hbm [shape: f32[1,240], index: 8, kind: input, shape index: {}]
  %s9 = inlined_call_operand.hbm [shape: bf16[240,784], index: 9, kind: input, shape index: {}]
  %s10 = inlined_call_operand.hbm [shape: f32[1,784], index: 10, kind: input, shape index: {}]
  %s11 = inlined_call_operand.hbm [shape: f32[8,784], index: 11, kind: output, shape index: {}]
  %s12 = sld [smem:[#allocation0]]
  $region98: #{tpu_custom_call.1} parent=0
    _
  %s14 = ssub.s32 1, %s12
  %s15 = scalar_select 0, %s14, %s12
  $region1: #{tpu_custom_call.1} parent=0
    #allocation2 [shape = 'u8[2048]{0}', space=vmem, size = 0x800, scoped, tag = 'input window, operand 0, single buffered']
    #allocation3 [shape = 's32[1]{0}', space=sflag, size = 0x4, scoped, tag = 'scoped memory for tpu_custom_call.1']
    #allocation4 [shape = 's32[1]{0}', space=sflag, size = 0x4, scoped, tag = 'scoped memory for tpu_custom_call.1']
    #allocation5 [shape = 'u8[2048]{0}', space=vmem, size = 0x800, scoped, tag = 'input window, operand 1, single buffered']
    #allocation6 [shape = 's32[1]{0}', space=sflag, size = 0x4, scoped, tag = 'scoped memory for tpu_custom_call.1']
    #allocation7 [shape = 'u8[53248]{0}', space=vmem, size = 0xd000, scoped, tag = 'input window, operand 2, single buffered']
    #allocation8 [shape = 'u8[8192]{0}', space=vmem, size = 0x2000, scoped, tag = 'input window, operand 3, single buffered']
    #allocation9 [shape = 's32[1]{0}', space=sflag, size = 0x4, scoped, tag = 'scoped memory for tpu_custom_call.1']
    #allocation10 [shape = 'u8[1024]{0}', space=vmem, size = 0x400, scoped, tag = 'input window, operand 4, single buffered']
    #allocation11 [shape = 'u8[122880]{0}', space=vmem, size = 0x1e000, scoped, tag = 'input window, operand 5, single buffered']
    #allocation12 [shape = 's32[1]{0}', space=sflag, size = 0x4, scoped, tag = 'scoped memory for tpu_custom_call.1']
    #allocation13 [shape = 'u8[1024]{0}', space=vmem, size = 0x400, scoped, tag = 'input window, operand 6, single buffered']
    #allocation14 [shape = 'u8[122880]{0}', space=vmem, size = 0x1e000, scoped, tag = 'input window, operand 7, single buffered']
    #allocation15 [shape = 's32[1]{0}', space=sflag, size = 0x4, scoped, tag = 'scoped memory for tpu_custom_call.1']
    #allocation16 [shape = 'u8[1024]{0}', space=vmem, size = 0x400, scoped, tag = 'input window, operand 8, single buffered']
    #allocation17 [shape = 'u8[430080]{0}', space=vmem, size = 0x69000, scoped, tag = 'input window, operand 9, single buffered']
    #allocation18 [shape = 's32[1]{0}', space=sflag, size = 0x4, scoped, tag = 'scoped memory for tpu_custom_call.1']
    #allocation19 [shape = 'u8[3584]{0}', space=vmem, size = 0x1000, scoped, tag = 'input window, operand 10, single buffered']
    #allocation20 [shape = 'u8[28672]{0}', space=vmem, size = 0x7000, scoped, tag = 'output window, operand 0, single buffered']
    %16 = vsyncpa [#allocation3], 0
    %17 = vsyncpa [#allocation6], 0
    %18 = vsyncpa [#allocation9], 0
    %19 = vsyncpa [#allocation12], 0
    %20 = vsyncpa [#allocation15], 0
    %21 = vsyncpa [#allocation18], 0
    %22 = vsyncpa [#allocation4], 0
    // Predicated region
    $region2: #{tpu_custom_call.1} parent=1 // pred_check
      _
    $region3: #{tpu_custom_call.1} parent=1 // pred_check_branch
      %24 = sbr.rel (0) target = $region5
    $region4: #{tpu_custom_call.1} parent=1 // pred_region
      %s26 = ssub.s32 64, 64
      %27 = vsyncadd [#allocation3], %s26
      %s29 = sshll.u32 [#allocation2], 4
      %s30 = int_to_ptr.vmem [resolvable:$true] %s29
      %32 = dma.hbm_to_vmem [thread:$0]  %s0, 64, %s30, [#allocation3]
    $region5: #{tpu_custom_call.1} parent=1 // pred_fallthru
      _
    // Predicated region
    $region6: #{tpu_custom_call.1} parent=1 // pred_check
      _
    $region7: #{tpu_custom_call.1} parent=1 // pred_check_branch
      %34 = sbr.rel (0) target = $region9
    $region8: #{tpu_custom_call.1} parent=1 // pred_region
      %s36 = ssub.s32 64, 64
      %37 = vsyncadd [#allocation6], %s36
      %s39 = sshll.u32 [#allocation5], 4
      %s40 = int_to_ptr.vmem [resolvable:$true] %s39
      %42 = dma.hbm_to_vmem [thread:$0]  %s1, 64, %s40, [#allocation6]
    $region9: #{tpu_custom_call.1} parent=1 // pred_fallthru
      _
    // Predicated region
    $region10: #{tpu_custom_call.1} parent=1 // pred_check
      _
    $region11: #{tpu_custom_call.1} parent=1 // pred_check_branch
      %44 = sbr.rel (0) target = $region13
    $region12: #{tpu_custom_call.1} parent=1 // pred_region
      %s46 = ssub.s32 1664, 1664
      %47 = vsyncadd [#allocation6], %s46
      %s48 = sshll.u32 [#allocation7], 4
      %s49 = int_to_ptr.vmem [resolvable:$true] %s48
      %54 = dma.hbm_to_vmem [thread:$0]  %s2, 1664, %s49, [#allocation6], 128, 128, 8
    $region13: #{tpu_custom_call.1} parent=1 // pred_fallthru
      _
    // Predicated region
    $region14: #{tpu_custom_call.1} parent=1 // pred_check
      _
    $region15: #{tpu_custom_call.1} parent=1 // pred_check_branch
      %56 = sbr.rel (0) target = $region17
    $region16: #{tpu_custom_call.1} parent=1 // pred_region
      %s58 = ssub.s32 256, 256
      %59 = vsyncadd [#allocation9], %s58
      %s60 = sshll.u32 [#allocation8], 4
      %s61 = int_to_ptr.vmem [resolvable:$true] %s60
      %66 = dma.hbm_to_vmem [thread:$0]  %s3, 256, %s61, [#allocation9], 128, 128, 8
    $region17: #{tpu_custom_call.1} parent=1 // pred_fallthru
      _
    // Predicated region
    $region18: #{tpu_custom_call.1} parent=1 // pred_check
      _
    $region19: #{tpu_custom_call.1} parent=1 // pred_check_branch
      %68 = sbr.rel (0) target = $region21
    $region20: #{tpu_custom_call.1} parent=1 // pred_region
      %s70 = ssub.s32 32, 32
      %71 = vsyncadd [#allocation9], %s70
      %s73 = sshll.u32 [#allocation10], 4
      %s74 = int_to_ptr.vmem [resolvable:$true] %s73
      %76 = dma.hbm_to_vmem [thread:$0]  %s4, 32, %s74, [#allocation9]
    $region21: #{tpu_custom_call.1} parent=1 // pred_fallthru
      _
    // Predicated region
    $region22: #{tpu_custom_call.1} parent=1 // pred_check
      _
    $region23: #{tpu_custom_call.1} parent=1 // pred_check_branch
      %78 = sbr.rel (0) target = $region25
    $region24: #{tpu_custom_call.1} parent=1 // pred_region
      %s80 = ssub.s32 3840, 3840
      %81 = vsyncadd [#allocation12], %s80
      %s82 = sshll.u32 [#allocation11], 4
      %s83 = int_to_ptr.vmem [resolvable:$true] %s82
      %88 = dma.hbm_to_vmem [thread:$0]  %s5, 3840, %s83, [#allocation12], 128, 128, 8
    $region25: #{tpu_custom_call.1} parent=1 // pred_fallthru
      _
    // Predicated region
    $region26: #{tpu_custom_call.1} parent=1 // pred_check
      _
    $region27: #{tpu_custom_call.1} parent=1 // pred_check_branch
      %90 = sbr.rel (0) target = $region29
    $region28: #{tpu_custom_call.1} parent=1 // pred_region
      %s92 = ssub.s32 32, 32
      %93 = vsyncadd [#allocation12], %s92
      %s95 = sshll.u32 [#allocation13], 4
      %s96 = int_to_ptr.vmem [resolvable:$true] %s95
      %98 = dma.hbm_to_vmem [thread:$0]  %s6, 32, %s96, [#allocation12]
    $region29: #{tpu_custom_call.1} parent=1 // pred_fallthru
      _
    // Predicated region
    $region30: #{tpu_custom_call.1} parent=1 // pred_check
      _
    $region31: #{tpu_custom_call.1} parent=1 // pred_check_branch
      %100 = sbr.rel (0) target = $region33
    $region32: #{tpu_custom_call.1} parent=1 // pred_region
      %s102 = ssub.s32 3840, 3840
      %103 = vsyncadd [#allocation15], %s102
      %s104 = sshll.u32 [#allocation14], 4
      %s105 = int_to_ptr.vmem [resolvable:$true] %s104
      %110 = dma.hbm_to_vmem [thread:$0]  %s7, 3840, %s105, [#allocation15], 128, 128, 8
    $region33: #{tpu_custom_call.1} parent=1 // pred_fallthru
      _
    // Predicated region
    $region34: #{tpu_custom_call.1} parent=1 // pred_check
      _
    $region35: #{tpu_custom_call.1} parent=1 // pred_check_branch
      %112 = sbr.rel (0) target = $region37
    $region36: #{tpu_custom_call.1} parent=1 // pred_region
      %s114 = ssub.s32 32, 32
      %115 = vsyncadd [#allocation15], %s114
      %s117 = sshll.u32 [#allocation16], 4
      %s118 = int_to_ptr.vmem [resolvable:$true] %s117
      %120 = dma.hbm_to_vmem [thread:$0]  %s8, 32, %s118, [#allocation15]
    $region37: #{tpu_custom_call.1} parent=1 // pred_fallthru
      _
    // Predicated region
    $region38: #{tpu_custom_call.1} parent=1 // pred_check
      _
    $region39: #{tpu_custom_call.1} parent=1 // pred_check_branch
      %122 = sbr.rel (0) target = $region41
    $region40: #{tpu_custom_call.1} parent=1 // pred_region
      %s124 = ssub.s32 13440, 13440
      %125 = vsyncadd [#allocation18], %s124
      %s126 = sshll.u32 [#allocation17], 4
      %s127 = int_to_ptr.vmem [resolvable:$true] %s126
      %132 = dma.hbm_to_vmem [thread:$0]  %s9, 13440, %s127, [#allocation18], 448, 448, 28
    $region41: #{tpu_custom_call.1} parent=1 // pred_fallthru
      _
    // Predicated region
    $region42: #{tpu_custom_call.1} parent=1 // pred_check
      _
    $region43: #{tpu_custom_call.1} parent=1 // pred_check_branch
      %134 = sbr.rel (0) target = $region45
    $region44: #{tpu_custom_call.1} parent=1 // pred_region
      %s136 = ssub.s32 112, 112
      %137 = vsyncadd [#allocation18], %s136
      %s139 = sshll.u32 [#allocation19], 4
      %s140 = int_to_ptr.vmem [resolvable:$true] %s139
      %142 = dma.hbm_to_vmem [thread:$0]  %s10, 112, %s140, [#allocation18]
    $region45: #{tpu_custom_call.1} parent=1 // pred_fallthru
      _
    // Predicated region
    $region46: #{tpu_custom_call.1} parent=1 // pred_check
      _
    $region47: #{tpu_custom_call.1} parent=1 // pred_check_branch
      %144 = sbr.rel (0) target = $region49
    $region48: #{tpu_custom_call.1} parent=1 // pred_region
      %145 = dma.done [#allocation3], 64
    $region49: #{tpu_custom_call.1} parent=1 // pred_fallthru
      _
    // Predicated region
    $region50: #{tpu_custom_call.1} parent=1 // pred_check
      _
    $region51: #{tpu_custom_call.1} parent=1 // pred_check_branch
      %147 = sbr.rel (0) target = $region53
    $region52: #{tpu_custom_call.1} parent=1 // pred_region
      %148 = dma.done [#allocation6], 64
    $region53: #{tpu_custom_call.1} parent=1 // pred_fallthru
      _
    // Predicated region
    $region54: #{tpu_custom_call.1} parent=1 // pred_check
      _
    $region55: #{tpu_custom_call.1} parent=1 // pred_check_branch
      %150 = sbr.rel (0) target = $region57
    $region56: #{tpu_custom_call.1} parent=1 // pred_region
      %151 = dma.done [#allocation6], 1664
    $region57: #{tpu_custom_call.1} parent=1 // pred_fallthru
      _
    // Predicated region
    $region58: #{tpu_custom_call.1} parent=1 // pred_check
      _
    $region59: #{tpu_custom_call.1} parent=1 // pred_check_branch
      %153 = sbr.rel (0) target = $region61
    $region60: #{tpu_custom_call.1} parent=1 // pred_region
      %154 = dma.done [#allocation9], 256
    $region61: #{tpu_custom_call.1} parent=1 // pred_fallthru
      _
    // Predicated region
    $region62: #{tpu_custom_call.1} parent=1 // pred_check
      _
    $region63: #{tpu_custom_call.1} parent=1 // pred_check_branch
      %156 = sbr.rel (0) target = $region65
    $region64: #{tpu_custom_call.1} parent=1 // pred_region
      %157 = dma.done [#allocation9], 32
    $region65: #{tpu_custom_call.1} parent=1 // pred_fallthru
      _
    // Predicated region
    $region66: #{tpu_custom_call.1} parent=1 // pred_check
      _
    $region67: #{tpu_custom_call.1} parent=1 // pred_check_branch
      %159 = sbr.rel (0) target = $region69
    $region68: #{tpu_custom_call.1} parent=1 // pred_region
      %160 = dma.done [#allocation12], 3840
    $region69: #{tpu_custom_call.1} parent=1 // pred_fallthru
      _
    // Predicated region
    $region70: #{tpu_custom_call.1} parent=1 // pred_check
      _
    $region71: #{tpu_custom_call.1} parent=1 // pred_check_branch
      %162 = sbr.rel (0) target = $region73
    $region72: #{tpu_custom_call.1} parent=1 // pred_region
      %163 = dma.done [#allocation12], 32
    $region73: #{tpu_custom_call.1} parent=1 // pred_fallthru
      _
    // Predicated region
    $region74: #{tpu_custom_call.1} parent=1 // pred_check
      _
    $region75: #{tpu_custom_call.1} parent=1 // pred_check_branch
      %165 = sbr.rel (0) target = $region77
    $region76: #{tpu_custom_call.1} parent=1 // pred_region
      %166 = dma.done [#allocation15], 3840
    $region77: #{tpu_custom_call.1} parent=1 // pred_fallthru
      _
    // Predicated region
    $region78: #{tpu_custom_call.1} parent=1 // pred_check
      _
    $region79: #{tpu_custom_call.1} parent=1 // pred_check_branch
      %168 = sbr.rel (0) target = $region81
    $region80: #{tpu_custom_call.1} parent=1 // pred_region
      %169 = dma.done [#allocation15], 32
    $region81: #{tpu_custom_call.1} parent=1 // pred_fallthru
      _
    // Predicated region
    $region82: #{tpu_custom_call.1} parent=1 // pred_check
      _
    $region83: #{tpu_custom_call.1} parent=1 // pred_check_branch
      %171 = sbr.rel (0) target = $region85
    $region84: #{tpu_custom_call.1} parent=1 // pred_region
      %172 = dma.done [#allocation18], 13440
    $region85: #{tpu_custom_call.1} parent=1 // pred_fallthru
      _
    // Predicated region
    $region86: #{tpu_custom_call.1} parent=1 // pred_check
      _
    $region87: #{tpu_custom_call.1} parent=1 // pred_check_branch
      %174 = sbr.rel (0) target = $region89
    $region88: #{tpu_custom_call.1} parent=1 // pred_region
      %175 = dma.done [#allocation18], 112
    $region89: #{tpu_custom_call.1} parent=1 // pred_fallthru
      _
    %v177 = vld [vmem:[#allocation2] sm:$0xf]
    %v178 = vld [vmem:[#allocation5] sm:$0xf]
    %v179 = vld [vmem:[#allocation7] sm:$0xff]
    %v180 = vld [vmem:[#allocation7 + $0x8] sm:$0xff]
    %v181 = vld [vmem:[#allocation7 + $0x10] sm:$0xff]
    %v182 = vld [vmem:[#allocation7 + $0x18] sm:$0xff]
    %v183 = vld [vmem:[#allocation7 + $0x20] sm:$0xff]
    %v184 = vld [vmem:[#allocation7 + $0x28] sm:$0xff]
    %v185 = vld [vmem:[#allocation7 + $0x30] sm:$0xff]
    %v186 = vld [vmem:[#allocation7 + $0x38] sm:$0xff]
    %v187 = vld [vmem:[#allocation7 + $0x40] sm:$0xff]
    %v188 = vld [vmem:[#allocation7 + $0x48] sm:$0xff]
    %v189 = vld [vmem:[#allocation7 + $0x50] sm:$0xff]
    %v190 = vld [vmem:[#allocation7 + $0x58] sm:$0xff]
    %v191 = vld [vmem:[#allocation7 + $0x60] sm:$0x33]
    %v192 = vld [vmem:[#allocation8] sm:$0xff]
    %v193 = vld [vmem:[#allocation8 + $0x8] sm:$0x11]
    %v196 = vunpack.c.l.b16 %v192
    %v197 = vunpack.c.h.b16 %v192
    %v198 = vunpack.c.l.b16 %v193
    %v199 = vunpack.c.h.b16 %v193
    %v200 = vpack.c.b16 %v198, %v196
    %v201 = vpack.c.b16 %v199, %v197
    %vm202 = vcmask 80896
    %v204 = vsel %vm202, %v178, 0
    %vm206 = vcmask 1044480
    %v208 = vsel %vm206, %v200, 0
    %v211 = vsel %vm206, %v201, 0
    %213 = vmatprep.subr.bf16.mxu0 %v211
    %214 = vmatpush1.bf16.msra.mxu0 %v208
    %215 = vmatprep.subr.bf16.mxu0 0
    %216 = vmatpush1.bf16.msra.mxu0 0
    %217 = vmatprep.subr.bf16.mxu0 0
    %218 = vmatpush1.bf16.msra.mxu0 0
    %219 = vmatprep.subr.bf16.mxu0 0
    %220 = vmatpush1.bf16.msra.mxu0 0
    %221 = vmatprep.subr.bf16.mxu0 0
    %222 = vmatpush1.bf16.msra.mxu0 0
    %223 = vmatprep.subr.bf16.mxu0 0
    %224 = vmatpush1.bf16.msra.mxu0 0
    %225 = vmatprep.subr.bf16.mxu0 0
    %226 = vmatpush1.bf16.msra.mxu0 0
    %227 = vmatprep.subr.bf16.mxu0 0
    %228 = vmatpush1.bf16.msra.mxu0 0
    %229 = vmatprep.subr.bf16.mxu0 0
    %230 = vmatpush1.bf16.msra.mxu0 0
    %231 = vmatprep.subr.bf16.mxu0 0
    %232 = vmatpush1.bf16.msra.mxu0 0
    %233 = vmatprep.subr.bf16.mxu0 0
    %234 = vmatpush1.bf16.msra.mxu0 0
    %235 = vmatprep.subr.bf16.mxu0 0
    %236 = vmatpush1.bf16.msra.mxu0 0
    %237 = vmatprep.subr.bf16.mxu0 0
    %238 = vmatpush1.bf16.msra.mxu0 0
    %239 = vmatprep.subr.bf16.mxu0 0
    %240 = vmatpush1.bf16.msra.mxu0 0
    %241 = vmatprep.subr.bf16.mxu0 0
    %242 = vmatpush1.bf16.msra.mxu0 0
    %243 = vmatprep.subr.bf16.mxu0 0
    %244 = vmatpush1.bf16.msra.mxu0 0
    %245 = vmatprep.mubr.bf16.mxu0 0
    %246 = vmatmul.mubr.bf16.gmra.mrb[0].mxu0 %v204
    %v247 = vpop.f32.mrb[0].mxu0
    %v248 = vadd.f32 0.0, %v247
    %v249 = vpop.f32.mrb[0].mxu0
    %v250 = vadd.f32 0.0, %v249
    %v251 = vpop.f32.mrb[0].mxu0
    %v252 = vpop.f32.mrb[0].mxu0
    %253 = vdwg.mxu0
    %v267 = vunpack.c.l.b16 %v179
    %v268 = vunpack.c.h.b16 %v179
    %v269 = vunpack.c.l.b16 %v180
    %v270 = vunpack.c.h.b16 %v180
    %v271 = vunpack.c.l.b16 %v181
    %v272 = vunpack.c.h.b16 %v181
    %v273 = vunpack.c.l.b16 %v182
    %v274 = vunpack.c.h.b16 %v182
    %v275 = vunpack.c.l.b16 %v183
    %v276 = vunpack.c.h.b16 %v183
    %v277 = vunpack.c.l.b16 %v184
    %v278 = vunpack.c.h.b16 %v184
    %v279 = vunpack.c.l.b16 %v185
    %v280 = vunpack.c.h.b16 %v185
    %v281 = vunpack.c.l.b16 %v186
    %v282 = vunpack.c.h.b16 %v186
    %v283 = vunpack.c.l.b16 %v187
    %v284 = vunpack.c.h.b16 %v187
    %v285 = vunpack.c.l.b16 %v188
    %v286 = vunpack.c.h.b16 %v188
    %v287 = vunpack.c.l.b16 %v189
    %v288 = vunpack.c.h.b16 %v189
    %v289 = vunpack.c.l.b16 %v190
    %v290 = vunpack.c.h.b16 %v190
    %v291 = vunpack.c.l.b16 %v191
    %v292 = vunpack.c.h.b16 %v191
    %v293 = vpack.c.b16 %v269, %v267
    %v294 = vpack.c.b16 %v270, %v268
    %v295 = vpack.c.b16 %v273, %v271
    %v296 = vpack.c.b16 %v274, %v272
    %v297 = vpack.c.b16 %v277, %v275
    %v298 = vpack.c.b16 %v278, %v276
    %v299 = vpack.c.b16 %v281, %v279
    %v300 = vpack.c.b16 %v282, %v280
    %v301 = vpack.c.b16 %v285, %v283
    %v302 = vpack.c.b16 %v286, %v284
    %v303 = vpack.c.b16 %v289, %v287
    %v304 = vpack.c.b16 %v290, %v288
    %v305 = vpack.c.b16 %v291, %v291
    %v306 = vpack.c.b16 %v292, %v292
    %vm319 = vcmask 818176
    %v321 = vsel %vm319, %v177, 0
    %vm323 = vcmask 1041408
    %v325 = vsel %vm323, %v305, 0
    %v328 = vsel %vm323, %v306, 0
    %330 = vmatprep.subr.bf16.mxu0 %v294
    %331 = vmatpush1.bf16.msra.mxu0 %v293
    %332 = vmatprep.subr.bf16.mxu0 %v296
    %333 = vmatpush1.bf16.msra.mxu0 %v295
    %334 = vmatprep.subr.bf16.mxu0 %v298
    %335 = vmatpush1.bf16.msra.mxu0 %v297
    %336 = vmatprep.subr.bf16.mxu0 %v300
    %337 = vmatpush1.bf16.msra.mxu0 %v299
    %338 = vmatprep.subr.bf16.mxu0 %v302
    %339 = vmatpush1.bf16.msra.mxu0 %v301
    %340 = vmatprep.subr.bf16.mxu0 %v304
    %341 = vmatpush1.bf16.msra.mxu0 %v303
    %342 = vmatprep.subr.bf16.mxu0 %v328
    %343 = vmatpush1.bf16.msra.mxu0 %v325
    %344 = vmatprep.subr.bf16.mxu0 0
    %345 = vmatpush1.bf16.msra.mxu0 0
    %346 = vmatprep.subr.bf16.mxu0 0
    %347 = vmatpush1.bf16.msra.mxu0 0
    %348 = vmatprep.subr.bf16.mxu0 0
    %349 = vmatpush1.bf16.msra.mxu0 0
    %350 = vmatprep.subr.bf16.mxu0 0
    %351 = vmatpush1.bf16.msra.mxu0 0
    %352 = vmatprep.subr.bf16.mxu0 0
    %353 = vmatpush1.bf16.msra.mxu0 0
    %354 = vmatprep.subr.bf16.mxu0 0
    %355 = vmatpush1.bf16.msra.mxu0 0
    %356 = vmatprep.subr.bf16.mxu0 0
    %357 = vmatpush1.bf16.msra.mxu0 0
    %358 = vmatprep.subr.bf16.mxu0 0
    %359 = vmatpush1.bf16.msra.mxu0 0
    %360 = vmatprep.subr.bf16.mxu0 0
    %361 = vmatpush1.bf16.msra.mxu0 0
    %362 = vmatprep.mubr.bf16.mxu0 0
    %363 = vmatmul.mubr.bf16.gmra.mrb[0].mxu0 %v321
    %v364 = vpop.f32.mrb[0].mxu0
    %v365 = vadd.f32 %v248, %v364
    %v366 = vpop.f32.mrb[0].mxu0
    %v367 = vadd.f32 %v250, %v366
    %v368 = vpop.f32.mrb[0].mxu0
    %v369 = vpop.f32.mrb[0].mxu0
    %370 = vdwg.mxu0
    %v371 = vld [vmem:[#allocation10] sm:$0x3]
    %v373 = vlaneseq
    %v374 = vshrl.u32 %v373, 7
    %v375 = vsub.s32 0, %v374
    %v376 = vrot.slane %v371, %v375
    %v377 = vlaneseq
    %v378 = vshrl.u32 %v377, 7
    %v379 = vsub.s32 1, %v378
    %v380 = vrot.slane %v371, %v379
    %v383 = vadd.f32 %v365, %v376
    %v384 = vadd.f32 %v367, %v380
    %v385 = vmax.f32 %v383, 0.0
    %v386 = vmax.f32 %v384, 0.0
    %v387 = vpack.c.bf16 %v385, %v385
    %v388 = vpack.c.bf16 %v386, %v386
    %v389 = vld [vmem:[#allocation11] sm:$0xff]
    %v390 = vld [vmem:[#allocation11 + $0x8] sm:$0xff]
    %v391 = vld [vmem:[#allocation11 + $0x10] sm:$0xff]
    %v392 = vld [vmem:[#allocation11 + $0x18] sm:$0xff]
    %v393 = vld [vmem:[#allocation11 + $0x20] sm:$0xff]
    %v394 = vld [vmem:[#allocation11 + $0x28] sm:$0xff]
    %v395 = vld [vmem:[#allocation11 + $0x30] sm:$0xff]
    %v396 = vld [vmem:[#allocation11 + $0x38] sm:$0xff]
    %v397 = vld [vmem:[#allocation11 + $0x40] sm:$0xff]
    %v398 = vld [vmem:[#allocation11 + $0x48] sm:$0xff]
    %v399 = vld [vmem:[#allocation11 + $0x50] sm:$0xff]
    %v400 = vld [vmem:[#allocation11 + $0x58] sm:$0xff]
    %v401 = vld [vmem:[#allocation11 + $0x60] sm:$0xff]
    %v402 = vld [vmem:[#allocation11 + $0x68] sm:$0xff]
    %v403 = vld [vmem:[#allocation11 + $0x70] sm:$0xff]
    %v404 = vld [vmem:[#allocation11 + $0x78] sm:$0xff]
    %v405 = vld [vmem:[#allocation11 + $0x80] sm:$0xff]
    %v406 = vld [vmem:[#allocation11 + $0x88] sm:$0xff]
    %v407 = vld [vmem:[#allocation11 + $0x90] sm:$0xff]
    %v408 = vld [vmem:[#allocation11 + $0x98] sm:$0xff]
    %v409 = vld [vmem:[#allocation11 + $0xa0] sm:$0xff]
    %v410 = vld [vmem:[#allocation11 + $0xa8] sm:$0xff]
    %v411 = vld [vmem:[#allocation11 + $0xb0] sm:$0xff]
    %v412 = vld [vmem:[#allocation11 + $0xb8] sm:$0xff]
    %v413 = vld [vmem:[#allocation11 + $0xc0] sm:$0xff]
    %v414 = vld [vmem:[#allocation11 + $0xc8] sm:$0xff]
    %v415 = vld [vmem:[#allocation11 + $0xd0] sm:$0xff]
    %v416 = vld [vmem:[#allocation11 + $0xd8] sm:$0xff]
    %v417 = vld [vmem:[#allocation11 + $0xe0] sm:$0xff]
    %v418 = vld [vmem:[#allocation11 + $0xe8] sm:$0xff]
    %v419 = vld [vmem:[#allocation13] sm:$0x3]
    %v421 = vlaneseq
    %v422 = vshrl.u32 %v421, 7
    %v423 = vsub.s32 0, %v422
    %v424 = vrot.slane %v419, %v423
    %v425 = vlaneseq
    %v426 = vshrl.u32 %v425, 7
    %v427 = vsub.s32 1, %v426
    %v428 = vrot.slane %v419, %v427
    %v461 = vunpack.c.l.b16 %v389
    %v462 = vunpack.c.h.b16 %v389
    %v463 = vunpack.c.l.b16 %v390
    %v464 = vunpack.c.h.b16 %v390
    %v465 = vunpack.c.l.b16 %v391
    %v466 = vunpack.c.h.b16 %v391
    %v467 = vunpack.c.l.b16 %v392
    %v468 = vunpack.c.h.b16 %v392
    %v469 = vunpack.c.l.b16 %v393
    %v470 = vunpack.c.h.b16 %v393
    %v471 = vunpack.c.l.b16 %v394
    %v472 = vunpack.c.h.b16 %v394
    %v473 = vunpack.c.l.b16 %v395
    %v474 = vunpack.c.h.b16 %v395
    %v475 = vunpack.c.l.b16 %v396
    %v476 = vunpack.c.h.b16 %v396
    %v477 = vunpack.c.l.b16 %v397
    %v478 = vunpack.c.h.b16 %v397
    %v479 = vunpack.c.l.b16 %v398
    %v480 = vunpack.c.h.b16 %v398
    %v481 = vunpack.c.l.b16 %v399
    %v482 = vunpack.c.h.b16 %v399
    %v483 = vunpack.c.l.b16 %v400
    %v484 = vunpack.c.h.b16 %v400
    %v485 = vunpack.c.l.b16 %v401
    %v486 = vunpack.c.h.b16 %v401
    %v487 = vunpack.c.l.b16 %v402
    %v488 = vunpack.c.h.b16 %v402
    %v489 = vunpack.c.l.b16 %v403
    %v490 = vunpack.c.h.b16 %v403
    %v491 = vunpack.c.l.b16 %v404
    %v492 = vunpack.c.h.b16 %v404
    %v493 = vunpack.c.l.b16 %v405
    %v494 = vunpack.c.h.b16 %v405
    %v495 = vunpack.c.l.b16 %v406
    %v496 = vunpack.c.h.b16 %v406
    %v497 = vunpack.c.l.b16 %v407
    %v498 = vunpack.c.h.b16 %v407
    %v499 = vunpack.c.l.b16 %v408
    %v500 = vunpack.c.h.b16 %v408
    %v501 = vunpack.c.l.b16 %v409
    %v502 = vunpack.c.h.b16 %v409
    %v503 = vunpack.c.l.b16 %v410
    %v504 = vunpack.c.h.b16 %v410
    %v505 = vunpack.c.l.b16 %v411
    %v506 = vunpack.c.h.b16 %v411
    %v507 = vunpack.c.l.b16 %v412
    %v508 = vunpack.c.h.b16 %v412
    %v509 = vunpack.c.l.b16 %v413
    %v510 = vunpack.c.h.b16 %v413
    %v511 = vunpack.c.l.b16 %v414
    %v512 = vunpack.c.h.b16 %v414
    %v513 = vunpack.c.l.b16 %v415
    %v514 = vunpack.c.h.b16 %v415
    %v515 = vunpack.c.l.b16 %v416
    %v516 = vunpack.c.h.b16 %v416
    %v517 = vunpack.c.l.b16 %v417
    %v518 = vunpack.c.h.b16 %v417
    %v519 = vunpack.c.l.b16 %v418
    %v520 = vunpack.c.h.b16 %v418
    %v521 = vpack.c.b16 %v463, %v461
    %v522 = vpack.c.b16 %v464, %v462
    %v523 = vpack.c.b16 %v467, %v465
    %v524 = vpack.c.b16 %v468, %v466
    %v525 = vpack.c.b16 %v471, %v469
    %v526 = vpack.c.b16 %v472, %v470
    %v527 = vpack.c.b16 %v475, %v473
    %v528 = vpack.c.b16 %v476, %v474
    %v529 = vpack.c.b16 %v479, %v477
    %v530 = vpack.c.b16 %v480, %v478
    %v531 = vpack.c.b16 %v483, %v481
    %v532 = vpack.c.b16 %v484, %v482
    %v533 = vpack.c.b16 %v487, %v485
    %v534 = vpack.c.b16 %v488, %v486
    %v535 = vpack.c.b16 %v491, %v489
    %v536 = vpack.c.b16 %v492, %v490
    %v537 = vpack.c.b16 %v495, %v493
    %v538 = vpack.c.b16 %v496, %v494
    %v539 = vpack.c.b16 %v499, %v497
    %v540 = vpack.c.b16 %v500, %v498
    %v541 = vpack.c.b16 %v503, %v501
    %v542 = vpack.c.b16 %v504, %v502
    %v543 = vpack.c.b16 %v507, %v505
    %v544 = vpack.c.b16 %v508, %v506
    %v545 = vpack.c.b16 %v511, %v509
    %v546 = vpack.c.b16 %v512, %v510
    %v547 = vpack.c.b16 %v515, %v513
    %v548 = vpack.c.b16 %v516, %v514
    %v549 = vpack.c.b16 %v519, %v517
    %v550 = vpack.c.b16 %v520, %v518
    %vm581 = vcmask 916480
    %v583 = vsel %vm581, %v388, 0
    %585 = vmatprep.subr.bf16.mxu0 %v522
    %586 = vmatpush1.bf16.msra.mxu0 %v521
    %587 = vmatprep.subr.bf16.mxu0 %v524
    %588 = vmatpush1.bf16.msra.mxu0 %v523
    %589 = vmatprep.subr.bf16.mxu0 %v526
    %590 = vmatpush1.bf16.msra.mxu0 %v525
    %591 = vmatprep.subr.bf16.mxu0 %v528
    %592 = vmatpush1.bf16.msra.mxu0 %v527
    %593 = vmatprep.subr.bf16.mxu0 %v530
    %594 = vmatpush1.bf16.msra.mxu0 %v529
    %595 = vmatprep.subr.bf16.mxu0 %v532
    %596 = vmatpush1.bf16.msra.mxu0 %v531
    %597 = vmatprep.subr.bf16.mxu0 %v534
    %598 = vmatpush1.bf16.msra.mxu0 %v533
    %599 = vmatprep.subr.bf16.mxu0 %v536
    %600 = vmatpush1.bf16.msra.mxu0 %v535
    %601 = vmatprep.subr.bf16.mxu0 %v538
    %602 = vmatpush1.bf16.msra.mxu0 %v537
    %603 = vmatprep.subr.bf16.mxu0 %v540
    %604 = vmatpush1.bf16.msra.mxu0 %v539
    %605 = vmatprep.subr.bf16.mxu0 %v542
    %606 = vmatpush1.bf16.msra.mxu0 %v541
    %607 = vmatprep.subr.bf16.mxu0 %v544
    %608 = vmatpush1.bf16.msra.mxu0 %v543
    %609 = vmatprep.subr.bf16.mxu0 %v546
    %610 = vmatpush1.bf16.msra.mxu0 %v545
    %611 = vmatprep.subr.bf16.mxu0 %v548
    %612 = vmatpush1.bf16.msra.mxu0 %v547
    %613 = vmatprep.subr.bf16.mxu0 %v550
    %614 = vmatpush1.bf16.msra.mxu0 %v549
    %615 = vmatprep.subr.bf16.mxu0 0
    %616 = vmatpush1.bf16.msra.mxu0 0
    %617 = vmatprep.mubr.bf16.mxu0 %v583
    %618 = vmatmul.mubr.bf16.gmra.mrb[0].mxu0 %v387
    %v619 = vpop.f32.mrb[0].mxu0
    %v620 = vadd.f32 %v424, %v619
    %v621 = vpop.f32.mrb[0].mxu0
    %v622 = vadd.f32 %v428, %v621
    %v623 = vpop.f32.mrb[0].mxu0
    %v624 = vpop.f32.mrb[0].mxu0
    %625 = vdwg.mxu0
    %v626 = vmax.f32 %v620, 0.0
    %v627 = vmax.f32 %v622, 0.0
    %v628 = vpack.c.bf16 %v626, %v626
    %v629 = vpack.c.bf16 %v627, %v627
    %v630 = vld [vmem:[#allocation14] sm:$0xff]
    %v631 = vld [vmem:[#allocation14 + $0x8] sm:$0xff]
    %v632 = vld [vmem:[#allocation14 + $0x10] sm:$0xff]
    %v633 = vld [vmem:[#allocation14 + $0x18] sm:$0xff]
    %v634 = vld [vmem:[#allocation14 + $0x20] sm:$0xff]
    %v635 = vld [vmem:[#allocation14 + $0x28] sm:$0xff]
    %v636 = vld [vmem:[#allocation14 + $0x30] sm:$0xff]
    %v637 = vld [vmem:[#allocation14 + $0x38] sm:$0xff]
    %v638 = vld [vmem:[#allocation14 + $0x40] sm:$0xff]
    %v639 = vld [vmem:[#allocation14 + $0x48] sm:$0xff]
    %v640 = vld [vmem:[#allocation14 + $0x50] sm:$0xff]
    %v641 = vld [vmem:[#allocation14 + $0x58] sm:$0xff]
    %v642 = vld [vmem:[#allocation14 + $0x60] sm:$0xff]
    %v643 = vld [vmem:[#allocation14 + $0x68] sm:$0xff]
    %v644 = vld [vmem:[#allocation14 + $0x70] sm:$0xff]
    %v645 = vld [vmem:[#allocation14 + $0x78] sm:$0xff]
    %v646 = vld [vmem:[#allocation14 + $0x80] sm:$0xff]
    %v647 = vld [vmem:[#allocation14 + $0x88] sm:$0xff]
    %v648 = vld [vmem:[#allocation14 + $0x90] sm:$0xff]
    %v649 = vld [vmem:[#allocation14 + $0x98] sm:$0xff]
    %v650 = vld [vmem:[#allocation14 + $0xa0] sm:$0xff]
    %v651 = vld [vmem:[#allocation14 + $0xa8] sm:$0xff]
    %v652 = vld [vmem:[#allocation14 + $0xb0] sm:$0xff]
    %v653 = vld [vmem:[#allocation14 + $0xb8] sm:$0xff]
    %v654 = vld [vmem:[#allocation14 + $0xc0] sm:$0xff]
    %v655 = vld [vmem:[#allocation14 + $0xc8] sm:$0xff]
    %v656 = vld [vmem:[#allocation14 + $0xd0] sm:$0xff]
    %v657 = vld [vmem:[#allocation14 + $0xd8] sm:$0xff]
    %v658 = vld [vmem:[#allocation14 + $0xe0] sm:$0xff]
    %v659 = vld [vmem:[#allocation14 + $0xe8] sm:$0xff]
    %v660 = vld [vmem:[#allocation16] sm:$0x3]
    %v662 = vlaneseq
    %v663 = vshrl.u32 %v662, 7
    %v664 = vsub.s32 0, %v663
    %v665 = vrot.slane %v660, %v664
    %v666 = vlaneseq
    %v667 = vshrl.u32 %v666, 7
    %v668 = vsub.s32 1, %v667
    %v669 = vrot.slane %v660, %v668
    %v702 = vunpack.c.l.b16 %v630
    %v703 = vunpack.c.h.b16 %v630
    %v704 = vunpack.c.l.b16 %v631
    %v705 = vunpack.c.h.b16 %v631
    %v706 = vunpack.c.l.b16 %v632
    %v707 = vunpack.c.h.b16 %v632
    %v708 = vunpack.c.l.b16 %v633
    %v709 = vunpack.c.h.b16 %v633
    %v710 = vunpack.c.l.b16 %v634
    %v711 = vunpack.c.h.b16 %v634
    %v712 = vunpack.c.l.b16 %v635
    %v713 = vunpack.c.h.b16 %v635
    %v714 = vunpack.c.l.b16 %v636
    %v715 = vunpack.c.h.b16 %v636
    %v716 = vunpack.c.l.b16 %v637
    %v717 = vunpack.c.h.b16 %v637
    %v718 = vunpack.c.l.b16 %v638
    %v719 = vunpack.c.h.b16 %v638
    %v720 = vunpack.c.l.b16 %v639
    %v721 = vunpack.c.h.b16 %v639
    %v722 = vunpack.c.l.b16 %v640
    %v723 = vunpack.c.h.b16 %v640
    %v724 = vunpack.c.l.b16 %v641
    %v725 = vunpack.c.h.b16 %v641
    %v726 = vunpack.c.l.b16 %v642
    %v727 = vunpack.c.h.b16 %v642
    %v728 = vunpack.c.l.b16 %v643
    %v729 = vunpack.c.h.b16 %v643
    %v730 = vunpack.c.l.b16 %v644
    %v731 = vunpack.c.h.b16 %v644
    %v732 = vunpack.c.l.b16 %v645
    %v733 = vunpack.c.h.b16 %v645
    %v734 = vunpack.c.l.b16 %v646
    %v735 = vunpack.c.h.b16 %v646
    %v736 = vunpack.c.l.b16 %v647
    %v737 = vunpack.c.h.b16 %v647
    %v738 = vunpack.c.l.b16 %v648
    %v739 = vunpack.c.h.b16 %v648
    %v740 = vunpack.c.l.b16 %v649
    %v741 = vunpack.c.h.b16 %v649
    %v742 = vunpack.c.l.b16 %v650
    %v743 = vunpack.c.h.b16 %v650
    %v744 = vunpack.c.l.b16 %v651
    %v745 = vunpack.c.h.b16 %v651
    %v746 = vunpack.c.l.b16 %v652
    %v747 = vunpack.c.h.b16 %v652
    %v748 = vunpack.c.l.b16 %v653
    %v749 = vunpack.c.h.b16 %v653
    %v750 = vunpack.c.l.b16 %v654
    %v751 = vunpack.c.h.b16 %v654
    %v752 = vunpack.c.l.b16 %v655
    %v753 = vunpack.c.h.b16 %v655
    %v754 = vunpack.c.l.b16 %v656
    %v755 = vunpack.c.h.b16 %v656
    %v756 = vunpack.c.l.b16 %v657
    %v757 = vunpack.c.h.b16 %v657
    %v758 = vunpack.c.l.b16 %v658
    %v759 = vunpack.c.h.b16 %v658
    %v760 = vunpack.c.l.b16 %v659
    %v761 = vunpack.c.h.b16 %v659
    %v762 = vpack.c.b16 %v704, %v702
    %v763 = vpack.c.b16 %v705, %v703
    %v764 = vpack.c.b16 %v708, %v706
    %v765 = vpack.c.b16 %v709, %v707
    %v766 = vpack.c.b16 %v712, %v710
    %v767 = vpack.c.b16 %v713, %v711
    %v768 = vpack.c.b16 %v716, %v714
    %v769 = vpack.c.b16 %v717, %v715
    %v770 = vpack.c.b16 %v720, %v718
    %v771 = vpack.c.b16 %v721, %v719
    %v772 = vpack.c.b16 %v724, %v722
    %v773 = vpack.c.b16 %v725, %v723
    %v774 = vpack.c.b16 %v728, %v726
    %v775 = vpack.c.b16 %v729, %v727
    %v776 = vpack.c.b16 %v732, %v730
    %v777 = vpack.c.b16 %v733, %v731
    %v778 = vpack.c.b16 %v736, %v734
    %v779 = vpack.c.b16 %v737, %v735
    %v780 = vpack.c.b16 %v740, %v738
    %v781 = vpack.c.b16 %v741, %v739
    %v782 = vpack.c.b16 %v744, %v742
    %v783 = vpack.c.b16 %v745, %v743
    %v784 = vpack.c.b16 %v748, %v746
    %v785 = vpack.c.b16 %v749, %v747
    %v786 = vpack.c.b16 %v752, %v750
    %v787 = vpack.c.b16 %v753, %v751
    %v788 = vpack.c.b16 %v756, %v754
    %v789 = vpack.c.b16 %v757, %v755
    %v790 = vpack.c.b16 %v760, %v758
    %v791 = vpack.c.b16 %v761, %v759
    %v823 = vsel %vm581, %v629, 0
    %825 = vmatprep.subr.bf16.mxu0 %v763
    %826 = vmatpush1.bf16.msra.mxu0 %v762
    %827 = vmatprep.subr.bf16.mxu0 %v765
    %828 = vmatpush1.bf16.msra.mxu0 %v764
    %829 = vmatprep.subr.bf16.mxu0 %v767
    %830 = vmatpush1.bf16.msra.mxu0 %v766
    %831 = vmatprep.subr.bf16.mxu0 %v769
    %832 = vmatpush1.bf16.msra.mxu0 %v768
    %833 = vmatprep.subr.bf16.mxu0 %v771
    %834 = vmatpush1.bf16.msra.mxu0 %v770
    %835 = vmatprep.subr.bf16.mxu0 %v773
    %836 = vmatpush1.bf16.msra.mxu0 %v772
    %837 = vmatprep.subr.bf16.mxu0 %v775
    %838 = vmatpush1.bf16.msra.mxu0 %v774
    %839 = vmatprep.subr.bf16.mxu0 %v777
    %840 = vmatpush1.bf16.msra.mxu0 %v776
    %841 = vmatprep.subr.bf16.mxu0 %v779
    %842 = vmatpush1.bf16.msra.mxu0 %v778
    %843 = vmatprep.subr.bf16.mxu0 %v781
    %844 = vmatpush1.bf16.msra.mxu0 %v780
    %845 = vmatprep.subr.bf16.mxu0 %v783
    %846 = vmatpush1.bf16.msra.mxu0 %v782
    %847 = vmatprep.subr.bf16.mxu0 %v785
    %848 = vmatpush1.bf16.msra.mxu0 %v784
    %849 = vmatprep.subr.bf16.mxu0 %v787
    %850 = vmatpush1.bf16.msra.mxu0 %v786
    %851 = vmatprep.subr.bf16.mxu0 %v789
    %852 = vmatpush1.bf16.msra.mxu0 %v788
    %853 = vmatprep.subr.bf16.mxu0 %v791
    %854 = vmatpush1.bf16.msra.mxu0 %v790
    %855 = vmatprep.subr.bf16.mxu0 0
    %856 = vmatpush1.bf16.msra.mxu0 0
    %857 = vmatprep.mubr.bf16.mxu0 %v823
    %858 = vmatmul.mubr.bf16.gmra.mrb[0].mxu0 %v628
    %v859 = vpop.f32.mrb[0].mxu0
    %v860 = vadd.f32 %v665, %v859
    %v861 = vpop.f32.mrb[0].mxu0
    %v862 = vadd.f32 %v669, %v861
    %v863 = vpop.f32.mrb[0].mxu0
    %v864 = vpop.f32.mrb[0].mxu0
    %865 = vdwg.mxu0
    %v866 = vmax.f32 %v860, 0.0
    %v867 = vmax.f32 %v862, 0.0
    %v868 = vpack.c.bf16 %v866, %v866
    %v869 = vpack.c.bf16 %v867, %v867
    %v870 = vld [vmem:[#allocation17] sm:$0xff]
    %v871 = vld [vmem:[#allocation17 + $0x8] sm:$0xff]
    %v872 = vld [vmem:[#allocation17 + $0x10] sm:$0xff]
    %v873 = vld [vmem:[#allocation17 + $0x18] sm:$0xf]
    %v874 = vld [vmem:[#allocation17 + $0x1c] sm:$0xff]
    %v875 = vld [vmem:[#allocation17 + $0x24] sm:$0xff]
    %v876 = vld [vmem:[#allocation17 + $0x2c] sm:$0xff]
    %v877 = vld [vmem:[#allocation17 + $0x34] sm:$0xf]
    %v878 = vld [vmem:[#allocation17 + $0x38] sm:$0xff]
    %v879 = vld [vmem:[#allocation17 + $0x40] sm:$0xff]
    %v880 = vld [vmem:[#allocation17 + $0x48] sm:$0xff]
    %v881 = vld [vmem:[#allocation17 + $0x50] sm:$0xf]
    %v882 = vld [vmem:[#allocation17 + $0x54] sm:$0xff]
    %v883 = vld [vmem:[#allocation17 + $0x5c] sm:$0xff]
    %v884 = vld [vmem:[#allocation17 + $0x64] sm:$0xff]
    %v885 = vld [vmem:[#allocation17 + $0x6c] sm:$0xf]
    %v886 = vld [vmem:[#allocation17 + $0x70] sm:$0xff]
    %v887 = vld [vmem:[#allocation17 + $0x78] sm:$0xff]
    %v888 = vld [vmem:[#allocation17 + $0x80] sm:$0xff]
    %v889 = vld [vmem:[#allocation17 + $0x88] sm:$0xf]
    %v890 = vld [vmem:[#allocation17 + $0x8c] sm:$0xff]
    %v891 = vld [vmem:[#allocation17 + $0x94] sm:$0xff]
    %v892 = vld [vmem:[#allocation17 + $0x9c] sm:$0xff]
    %v893 = vld [vmem:[#allocation17 + $0xa4] sm:$0xf]
    %v894 = vld [vmem:[#allocation17 + $0xa8] sm:$0xff]
    %v895 = vld [vmem:[#allocation17 + $0xb0] sm:$0xff]
    %v896 = vld [vmem:[#allocation17 + $0xb8] sm:$0xff]
    %v897 = vld [vmem:[#allocation17 + $0xc0] sm:$0xf]
    %v898 = vld [vmem:[#allocation17 + $0xc4] sm:$0xff]
    %v899 = vld [vmem:[#allocation17 + $0xcc] sm:$0xff]
    %v900 = vld [vmem:[#allocation17 + $0xd4] sm:$0xff]
    %v901 = vld [vmem:[#allocation17 + $0xdc] sm:$0xf]
    %v902 = vld [vmem:[#allocation17 + $0xe0] sm:$0xff]
    %v903 = vld [vmem:[#allocation17 + $0xe8] sm:$0xff]
    %v904 = vld [vmem:[#allocation17 + $0xf0] sm:$0xff]
    %v905 = vld [vmem:[#allocation17 + $0xf8] sm:$0xf]
    %v906 = vld [vmem:[#allocation17 + $0xfc] sm:$0xff]
    %v907 = vld [vmem:[#allocation17 + $0x104] sm:$0xff]
    %v908 = vld [vmem:[#allocation17 + $0x10c] sm:$0xff]
    %v909 = vld [vmem:[#allocation17 + $0x114] sm:$0xf]
    %v910 = vld [vmem:[#allocation17 + $0x118] sm:$0xff]
    %v911 = vld [vmem:[#allocation17 + $0x120] sm:$0xff]
    %v912 = vld [vmem:[#allocation17 + $0x128] sm:$0xff]
    %v913 = vld [vmem:[#allocation17 + $0x130] sm:$0xf]
    %v914 = vld [vmem:[#allocation17 + $0x134] sm:$0xff]
    %v915 = vld [vmem:[#allocation17 + $0x13c] sm:$0xff]
    %v916 = vld [vmem:[#allocation17 + $0x144] sm:$0xff]
    %v917 = vld [vmem:[#allocation17 + $0x14c] sm:$0xf]
    %v918 = vld [vmem:[#allocation17 + $0x150] sm:$0xff]
    %v919 = vld [vmem:[#allocation17 + $0x158] sm:$0xff]
    %v920 = vld [vmem:[#allocation17 + $0x160] sm:$0xff]
    %v921 = vld [vmem:[#allocation17 + $0x168] sm:$0xf]
    %v922 = vld [vmem:[#allocation17 + $0x16c] sm:$0xff]
    %v923 = vld [vmem:[#allocation17 + $0x174] sm:$0xff]
    %v924 = vld [vmem:[#allocation17 + $0x17c] sm:$0xff]
    %v925 = vld [vmem:[#allocation17 + $0x184] sm:$0xf]
    %v926 = vld [vmem:[#allocation17 + $0x188] sm:$0xff]
    %v927 = vld [vmem:[#allocation17 + $0x190] sm:$0xff]
    %v928 = vld [vmem:[#allocation17 + $0x198] sm:$0xff]
    %v929 = vld [vmem:[#allocation17 + $0x1a0] sm:$0xf]
    %v930 = vld [vmem:[#allocation17 + $0x1a4] sm:$0xff]
    %v931 = vld [vmem:[#allocation17 + $0x1ac] sm:$0xff]
    %v932 = vld [vmem:[#allocation17 + $0x1b4] sm:$0xff]
    %v933 = vld [vmem:[#allocation17 + $0x1bc] sm:$0xf]
    %v934 = vld [vmem:[#allocation17 + $0x1c0] sm:$0xff]
    %v935 = vld [vmem:[#allocation17 + $0x1c8] sm:$0xff]
    %v936 = vld [vmem:[#allocation17 + $0x1d0] sm:$0xff]
    %v937 = vld [vmem:[#allocation17 + $0x1d8] sm:$0xf]
    %v938 = vld [vmem:[#allocation17 + $0x1dc] sm:$0xff]
    %v939 = vld [vmem:[#allocation17 + $0x1e4] sm:$0xff]
    %v940 = vld [vmem:[#allocation17 + $0x1ec] sm:$0xff]
    %v941 = vld [vmem:[#allocation17 + $0x1f4] sm:$0xf]
    %v942 = vld [vmem:[#allocation17 + $0x1f8] sm:$0xff]
    %v943 = vld [vmem:[#allocation17 + $0x200] sm:$0xff]
    %v944 = vld [vmem:[#allocation17 + $0x208] sm:$0xff]
    %v945 = vld [vmem:[#allocation17 + $0x210] sm:$0xf]
    %v946 = vld [vmem:[#allocation17 + $0x214] sm:$0xff]
    %v947 = vld [vmem:[#allocation17 + $0x21c] sm:$0xff]
    %v948 = vld [vmem:[#allocation17 + $0x224] sm:$0xff]
    %v949 = vld [vmem:[#allocation17 + $0x22c] sm:$0xf]
    %v950 = vld [vmem:[#allocation17 + $0x230] sm:$0xff]
    %v951 = vld [vmem:[#allocation17 + $0x238] sm:$0xff]
    %v952 = vld [vmem:[#allocation17 + $0x240] sm:$0xff]
    %v953 = vld [vmem:[#allocation17 + $0x248] sm:$0xf]
    %v954 = vld [vmem:[#allocation17 + $0x24c] sm:$0xff]
    %v955 = vld [vmem:[#allocation17 + $0x254] sm:$0xff]
    %v956 = vld [vmem:[#allocation17 + $0x25c] sm:$0xff]
    %v957 = vld [vmem:[#allocation17 + $0x264] sm:$0xf]
    %v958 = vld [vmem:[#allocation17 + $0x268] sm:$0xff]
    %v959 = vld [vmem:[#allocation17 + $0x270] sm:$0xff]
    %v960 = vld [vmem:[#allocation17 + $0x278] sm:$0xff]
    %v961 = vld [vmem:[#allocation17 + $0x280] sm:$0xf]
    %v962 = vld [vmem:[#allocation17 + $0x284] sm:$0xff]
    %v963 = vld [vmem:[#allocation17 + $0x28c] sm:$0xff]
    %v964 = vld [vmem:[#allocation17 + $0x294] sm:$0xff]
    %v965 = vld [vmem:[#allocation17 + $0x29c] sm:$0xf]
    %v966 = vld [vmem:[#allocation17 + $0x2a0] sm:$0xff]
    %v967 = vld [vmem:[#allocation17 + $0x2a8] sm:$0xff]
    %v968 = vld [vmem:[#allocation17 + $0x2b0] sm:$0xff]
    %v969 = vld [vmem:[#allocation17 + $0x2b8] sm:$0xf]
    %v970 = vld [vmem:[#allocation17 + $0x2bc] sm:$0xff]
    %v971 = vld [vmem:[#allocation17 + $0x2c4] sm:$0xff]
    %v972 = vld [vmem:[#allocation17 + $0x2cc] sm:$0xff]
    %v973 = vld [vmem:[#allocation17 + $0x2d4] sm:$0xf]
    %v974 = vld [vmem:[#allocation17 + $0x2d8] sm:$0xff]
    %v975 = vld [vmem:[#allocation17 + $0x2e0] sm:$0xff]
    %v976 = vld [vmem:[#allocation17 + $0x2e8] sm:$0xff]
    %v977 = vld [vmem:[#allocation17 + $0x2f0] sm:$0xf]
    %v978 = vld [vmem:[#allocation17 + $0x2f4] sm:$0xff]
    %v979 = vld [vmem:[#allocation17 + $0x2fc] sm:$0xff]
    %v980 = vld [vmem:[#allocation17 + $0x304] sm:$0xff]
    %v981 = vld [vmem:[#allocation17 + $0x30c] sm:$0xf]
    %v982 = vld [vmem:[#allocation17 + $0x310] sm:$0xff]
    %v983 = vld [vmem:[#allocation17 + $0x318] sm:$0xff]
    %v984 = vld [vmem:[#allocation17 + $0x320] sm:$0xff]
    %v985 = vld [vmem:[#allocation17 + $0x328] sm:$0xf]
    %v986 = vld [vmem:[#allocation17 + $0x32c] sm:$0xff]
    %v987 = vld [vmem:[#allocation17 + $0x334] sm:$0xff]
    %v988 = vld [vmem:[#allocation17 + $0x33c] sm:$0xff]
    %v989 = vld [vmem:[#allocation17 + $0x344] sm:$0xf]
    %v990 = vld [vmem:[#allocation19] sm:$0x7f]
    %v992 = vlaneseq
    %v993 = vshrl.u32 %v992, 7
    %v994 = vsub.s32 0, %v993
    %v995 = vrot.slane %v990, %v994
    %v996 = vlaneseq
    %v997 = vshrl.u32 %v996, 7
    %v998 = vsub.s32 1, %v997
    %v999 = vrot.slane %v990, %v998
    %v1000 = vlaneseq
    %v1001 = vshrl.u32 %v1000, 7
    %v1002 = vsub.s32 2, %v1001
    %v1003 = vrot.slane %v990, %v1002
    %v1004 = vlaneseq
    %v1005 = vshrl.u32 %v1004, 7
    %v1006 = vsub.s32 3, %v1005
    %v1007 = vrot.slane %v990, %v1006
    %v1008 = vlaneseq
    %v1009 = vshrl.u32 %v1008, 7
    %v1010 = vsub.s32 4, %v1009
    %v1011 = vrot.slane %v990, %v1010
    %v1012 = vlaneseq
    %v1013 = vshrl.u32 %v1012, 7
    %v1014 = vsub.s32 5, %v1013
    %v1015 = vrot.slane %v990, %v1014
    %v1016 = vlaneseq
    %v1017 = vshrl.u32 %v1016, 7
    %v1018 = vsub.s32 6, %v1017
    %v1019 = vrot.slane %v990, %v1018
    %v1147 = vunpack.c.l.b16 %v870
    %v1148 = vunpack.c.h.b16 %v870
    %v1149 = vunpack.c.l.b16 %v871
    %v1150 = vunpack.c.h.b16 %v871
    %v1151 = vunpack.c.l.b16 %v872
    %v1152 = vunpack.c.h.b16 %v872
    %v1153 = vunpack.c.l.b16 %v873
    %v1154 = vunpack.c.l.b16 %v874
    %v1155 = vunpack.c.h.b16 %v874
    %v1156 = vunpack.c.l.b16 %v875
    %v1157 = vunpack.c.h.b16 %v875
    %v1158 = vunpack.c.l.b16 %v876
    %v1159 = vunpack.c.h.b16 %v876
    %v1160 = vunpack.c.l.b16 %v877
    %v1161 = vunpack.c.l.b16 %v878
    %v1162 = vunpack.c.h.b16 %v878
    %v1163 = vunpack.c.l.b16 %v879
    %v1164 = vunpack.c.h.b16 %v879
    %v1165 = vunpack.c.l.b16 %v880
    %v1166 = vunpack.c.h.b16 %v880
    %v1167 = vunpack.c.l.b16 %v881
    %v1168 = vunpack.c.l.b16 %v882
    %v1169 = vunpack.c.h.b16 %v882
    %v1170 = vunpack.c.l.b16 %v883
    %v1171 = vunpack.c.h.b16 %v883
    %v1172 = vunpack.c.l.b16 %v884
    %v1173 = vunpack.c.h.b16 %v884
    %v1174 = vunpack.c.l.b16 %v885
    %v1175 = vunpack.c.l.b16 %v886
    %v1176 = vunpack.c.h.b16 %v886
    %v1177 = vunpack.c.l.b16 %v887
    %v1178 = vunpack.c.h.b16 %v887
    %v1179 = vunpack.c.l.b16 %v888
    %v1180 = vunpack.c.h.b16 %v888
    %v1181 = vunpack.c.l.b16 %v889
    %v1182 = vunpack.c.l.b16 %v890
    %v1183 = vunpack.c.h.b16 %v890
    %v1184 = vunpack.c.l.b16 %v891
    %v1185 = vunpack.c.h.b16 %v891
    %v1186 = vunpack.c.l.b16 %v892
    %v1187 = vunpack.c.h.b16 %v892
    %v1188 = vunpack.c.l.b16 %v893
    %v1189 = vunpack.c.l.b16 %v894
    %v1190 = vunpack.c.h.b16 %v894
    %v1191 = vunpack.c.l.b16 %v895
    %v1192 = vunpack.c.h.b16 %v895
    %v1193 = vunpack.c.l.b16 %v896
    %v1194 = vunpack.c.h.b16 %v896
    %v1195 = vunpack.c.l.b16 %v897
    %v1196 = vunpack.c.l.b16 %v898
    %v1197 = vunpack.c.h.b16 %v898
    %v1198 = vunpack.c.l.b16 %v899
    %v1199 = vunpack.c.h.b16 %v899
    %v1200 = vunpack.c.l.b16 %v900
    %v1201 = vunpack.c.h.b16 %v900
    %v1202 = vunpack.c.l.b16 %v901
    %v1203 = vunpack.c.l.b16 %v902
    %v1204 = vunpack.c.h.b16 %v902
    %v1205 = vunpack.c.l.b16 %v903
    %v1206 = vunpack.c.h.b16 %v903
    %v1207 = vunpack.c.l.b16 %v904
    %v1208 = vunpack.c.h.b16 %v904
    %v1209 = vunpack.c.l.b16 %v905
    %v1210 = vunpack.c.l.b16 %v906
    %v1211 = vunpack.c.h.b16 %v906
    %v1212 = vunpack.c.l.b16 %v907
    %v1213 = vunpack.c.h.b16 %v907
    %v1214 = vunpack.c.l.b16 %v908
    %v1215 = vunpack.c.h.b16 %v908
    %v1216 = vunpack.c.l.b16 %v909
    %v1217 = vunpack.c.l.b16 %v910
    %v1218 = vunpack.c.h.b16 %v910
    %v1219 = vunpack.c.l.b16 %v911
    %v1220 = vunpack.c.h.b16 %v911
    %v1221 = vunpack.c.l.b16 %v912
    %v1222 = vunpack.c.h.b16 %v912
    %v1223 = vunpack.c.l.b16 %v913
    %v1224 = vunpack.c.l.b16 %v914
    %v1225 = vunpack.c.h.b16 %v914
    %v1226 = vunpack.c.l.b16 %v915
    %v1227 = vunpack.c.h.b16 %v915
    %v1228 = vunpack.c.l.b16 %v916
    %v1229 = vunpack.c.h.b16 %v916
    %v1230 = vunpack.c.l.b16 %v917
    %v1231 = vunpack.c.l.b16 %v918
    %v1232 = vunpack.c.h.b16 %v918
    %v1233 = vunpack.c.l.b16 %v919
    %v1234 = vunpack.c.h.b16 %v919
    %v1235 = vunpack.c.l.b16 %v920
    %v1236 = vunpack.c.h.b16 %v920
    %v1237 = vunpack.c.l.b16 %v921
    %v1238 = vunpack.c.l.b16 %v922
    %v1239 = vunpack.c.h.b16 %v922
    %v1240 = vunpack.c.l.b16 %v923
    %v1241 = vunpack.c.h.b16 %v923
    %v1242 = vunpack.c.l.b16 %v924
    %v1243 = vunpack.c.h.b16 %v924
    %v1244 = vunpack.c.l.b16 %v925
    %v1245 = vunpack.c.l.b16 %v926
    %v1246 = vunpack.c.h.b16 %v926
    %v1247 = vunpack.c.l.b16 %v927
    %v1248 = vunpack.c.h.b16 %v927
    %v1249 = vunpack.c.l.b16 %v928
    %v1250 = vunpack.c.h.b16 %v928
    %v1251 = vunpack.c.l.b16 %v929
    %v1252 = vunpack.c.l.b16 %v930
    %v1253 = vunpack.c.h.b16 %v930
    %v1254 = vunpack.c.l.b16 %v931
    %v1255 = vunpack.c.h.b16 %v931
    %v1256 = vunpack.c.l.b16 %v932
    %v1257 = vunpack.c.h.b16 %v932
    %v1258 = vunpack.c.l.b16 %v933
    %v1259 = vunpack.c.l.b16 %v934
    %v1260 = vunpack.c.h.b16 %v934
    %v1261 = vunpack.c.l.b16 %v935
    %v1262 = vunpack.c.h.b16 %v935
    %v1263 = vunpack.c.l.b16 %v936
    %v1264 = vunpack.c.h.b16 %v936
    %v1265 = vunpack.c.l.b16 %v937
    %v1266 = vunpack.c.l.b16 %v938
    %v1267 = vunpack.c.h.b16 %v938
    %v1268 = vunpack.c.l.b16 %v939
    %v1269 = vunpack.c.h.b16 %v939
    %v1270 = vunpack.c.l.b16 %v940
    %v1271 = vunpack.c.h.b16 %v940
    %v1272 = vunpack.c.l.b16 %v941
    %v1273 = vunpack.c.l.b16 %v942
    %v1274 = vunpack.c.h.b16 %v942
    %v1275 = vunpack.c.l.b16 %v943
    %v1276 = vunpack.c.h.b16 %v943
    %v1277 = vunpack.c.l.b16 %v944
    %v1278 = vunpack.c.h.b16 %v944
    %v1279 = vunpack.c.l.b16 %v945
    %v1280 = vunpack.c.l.b16 %v946
    %v1281 = vunpack.c.h.b16 %v946
    %v1282 = vunpack.c.l.b16 %v947
    %v1283 = vunpack.c.h.b16 %v947
    %v1284 = vunpack.c.l.b16 %v948
    %v1285 = vunpack.c.h.b16 %v948
    %v1286 = vunpack.c.l.b16 %v949
    %v1287 = vunpack.c.l.b16 %v950
    %v1288 = vunpack.c.h.b16 %v950
    %v1289 = vunpack.c.l.b16 %v951
    %v1290 = vunpack.c.h.b16 %v951
    %v1291 = vunpack.c.l.b16 %v952
    %v1292 = vunpack.c.h.b16 %v952
    %v1293 = vunpack.c.l.b16 %v953
    %v1294 = vunpack.c.l.b16 %v954
    %v1295 = vunpack.c.h.b16 %v954
    %v1296 = vunpack.c.l.b16 %v955
    %v1297 = vunpack.c.h.b16 %v955
    %v1298 = vunpack.c.l.b16 %v956
    %v1299 = vunpack.c.h.b16 %v956
    %v1300 = vunpack.c.l.b16 %v957
    %v1301 = vunpack.c.l.b16 %v958
    %v1302 = vunpack.c.h.b16 %v958
    %v1303 = vunpack.c.l.b16 %v959
    %v1304 = vunpack.c.h.b16 %v959
    %v1305 = vunpack.c.l.b16 %v960
    %v1306 = vunpack.c.h.b16 %v960
    %v1307 = vunpack.c.l.b16 %v961
    %v1308 = vunpack.c.l.b16 %v962
    %v1309 = vunpack.c.h.b16 %v962
    %v1310 = vunpack.c.l.b16 %v963
    %v1311 = vunpack.c.h.b16 %v963
    %v1312 = vunpack.c.l.b16 %v964
    %v1313 = vunpack.c.h.b16 %v964
    %v1314 = vunpack.c.l.b16 %v965
    %v1315 = vunpack.c.l.b16 %v966
    %v1316 = vunpack.c.h.b16 %v966
    %v1317 = vunpack.c.l.b16 %v967
    %v1318 = vunpack.c.h.b16 %v967
    %v1319 = vunpack.c.l.b16 %v968
    %v1320 = vunpack.c.h.b16 %v968
    %v1321 = vunpack.c.l.b16 %v969
    %v1322 = vunpack.c.l.b16 %v970
    %v1323 = vunpack.c.h.b16 %v970
    %v1324 = vunpack.c.l.b16 %v971
    %v1325 = vunpack.c.h.b16 %v971
    %v1326 = vunpack.c.l.b16 %v972
    %v1327 = vunpack.c.h.b16 %v972
    %v1328 = vunpack.c.l.b16 %v973
    %v1329 = vunpack.c.l.b16 %v974
    %v1330 = vunpack.c.h.b16 %v974
    %v1331 = vunpack.c.l.b16 %v975
    %v1332 = vunpack.c.h.b16 %v975
    %v1333 = vunpack.c.l.b16 %v976
    %v1334 = vunpack.c.h.b16 %v976
    %v1335 = vunpack.c.l.b16 %v977
    %v1336 = vunpack.c.l.b16 %v978
    %v1337 = vunpack.c.h.b16 %v978
    %v1338 = vunpack.c.l.b16 %v979
    %v1339 = vunpack.c.h.b16 %v979
    %v1340 = vunpack.c.l.b16 %v980
    %v1341 = vunpack.c.h.b16 %v980
    %v1342 = vunpack.c.l.b16 %v981
    %v1343 = vunpack.c.l.b16 %v982
    %v1344 = vunpack.c.h.b16 %v982
    %v1345 = vunpack.c.l.b16 %v983
    %v1346 = vunpack.c.h.b16 %v983
    %v1347 = vunpack.c.l.b16 %v984
    %v1348 = vunpack.c.h.b16 %v984
    %v1349 = vunpack.c.l.b16 %v985
    %v1350 = vunpack.c.l.b16 %v986
    %v1351 = vunpack.c.h.b16 %v986
    %v1352 = vunpack.c.l.b16 %v987
    %v1353 = vunpack.c.h.b16 %v987
    %v1354 = vunpack.c.l.b16 %v988
    %v1355 = vunpack.c.h.b16 %v988
    %v1356 = vunpack.c.l.b16 %v989
    %v1357 = vpack.c.b16 %v1154, %v1147
    %v1358 = vpack.c.b16 %v1155, %v1148
    %v1359 = vpack.c.b16 %v1156, %v1149
    %v1360 = vpack.c.b16 %v1157, %v1150
    %v1361 = vpack.c.b16 %v1158, %v1151
    %v1362 = vpack.c.b16 %v1159, %v1152
    %v1363 = vpack.c.b16 %v1160, %v1153
    %v1364 = vpack.c.b16 %v1168, %v1161
    %v1365 = vpack.c.b16 %v1169, %v1162
    %v1366 = vpack.c.b16 %v1170, %v1163
    %v1367 = vpack.c.b16 %v1171, %v1164
    %v1368 = vpack.c.b16 %v1172, %v1165
    %v1369 = vpack.c.b16 %v1173, %v1166
    %v1370 = vpack.c.b16 %v1174, %v1167
    %v1371 = vpack.c.b16 %v1182, %v1175
    %v1372 = vpack.c.b16 %v1183, %v1176
    %v1373 = vpack.c.b16 %v1184, %v1177
    %v1374 = vpack.c.b16 %v1185, %v1178
    %v1375 = vpack.c.b16 %v1186, %v1179
    %v1376 = vpack.c.b16 %v1187, %v1180
    %v1377 = vpack.c.b16 %v1188, %v1181
    %v1378 = vpack.c.b16 %v1196, %v1189
    %v1379 = vpack.c.b16 %v1197, %v1190
    %v1380 = vpack.c.b16 %v1198, %v1191
    %v1381 = vpack.c.b16 %v1199, %v1192
    %v1382 = vpack.c.b16 %v1200, %v1193
    %v1383 = vpack.c.b16 %v1201, %v1194
    %v1384 = vpack.c.b16 %v1202, %v1195
    %v1385 = vpack.c.b16 %v1210, %v1203
    %v1386 = vpack.c.b16 %v1211, %v1204
    %v1387 = vpack.c.b16 %v1212, %v1205
    %v1388 = vpack.c.b16 %v1213, %v1206
    %v1389 = vpack.c.b16 %v1214, %v1207
    %v1390 = vpack.c.b16 %v1215, %v1208
    %v1391 = vpack.c.b16 %v1216, %v1209
    %v1392 = vpack.c.b16 %v1224, %v1217
    %v1393 = vpack.c.b16 %v1225, %v1218
    %v1394 = vpack.c.b16 %v1226, %v1219
    %v1395 = vpack.c.b16 %v1227, %v1220
    %v1396 = vpack.c.b16 %v1228, %v1221
    %v1397 = vpack.c.b16 %v1229, %v1222
    %v1398 = vpack.c.b16 %v1230, %v1223
    %v1399 = vpack.c.b16 %v1238, %v1231
    %v1400 = vpack.c.b16 %v1239, %v1232
    %v1401 = vpack.c.b16 %v1240, %v1233
    %v1402 = vpack.c.b16 %v1241, %v1234
    %v1403 = vpack.c.b16 %v1242, %v1235
    %v1404 = vpack.c.b16 %v1243, %v1236
    %v1405 = vpack.c.b16 %v1244, %v1237
    %v1406 = vpack.c.b16 %v1252, %v1245
    %v1407 = vpack.c.b16 %v1253, %v1246
    %v1408 = vpack.c.b16 %v1254, %v1247
    %v1409 = vpack.c.b16 %v1255, %v1248
    %v1410 = vpack.c.b16 %v1256, %v1249
    %v1411 = vpack.c.b16 %v1257, %v1250
    %v1412 = vpack.c.b16 %v1258, %v1251
    %v1413 = vpack.c.b16 %v1266, %v1259
    %v1414 = vpack.c.b16 %v1267, %v1260
    %v1415 = vpack.c.b16 %v1268, %v1261
    %v1416 = vpack.c.b16 %v1269, %v1262
    %v1417 = vpack.c.b16 %v1270, %v1263
    %v1418 = vpack.c.b16 %v1271, %v1264
    %v1419 = vpack.c.b16 %v1272, %v1265
    %v1420 = vpack.c.b16 %v1280, %v1273
    %v1421 = vpack.c.b16 %v1281, %v1274
    %v1422 = vpack.c.b16 %v1282, %v1275
    %v1423 = vpack.c.b16 %v1283, %v1276
    %v1424 = vpack.c.b16 %v1284, %v1277
    %v1425 = vpack.c.b16 %v1285, %v1278
    %v1426 = vpack.c.b16 %v1286, %v1279
    %v1427 = vpack.c.b16 %v1294, %v1287
    %v1428 = vpack.c.b16 %v1295, %v1288
    %v1429 = vpack.c.b16 %v1296, %v1289
    %v1430 = vpack.c.b16 %v1297, %v1290
    %v1431 = vpack.c.b16 %v1298, %v1291
    %v1432 = vpack.c.b16 %v1299, %v1292
    %v1433 = vpack.c.b16 %v1300, %v1293
    %v1434 = vpack.c.b16 %v1308, %v1301
    %v1435 = vpack.c.b16 %v1309, %v1302
    %v1436 = vpack.c.b16 %v1310, %v1303
    %v1437 = vpack.c.b16 %v1311, %v1304
    %v1438 = vpack.c.b16 %v1312, %v1305
    %v1439 = vpack.c.b16 %v1313, %v1306
    %v1440 = vpack.c.b16 %v1314, %v1307
    %v1441 = vpack.c.b16 %v1322, %v1315
    %v1442 = vpack.c.b16 %v1323, %v1316
    %v1443 = vpack.c.b16 %v1324, %v1317
    %v1444 = vpack.c.b16 %v1325, %v1318
    %v1445 = vpack.c.b16 %v1326, %v1319
    %v1446 = vpack.c.b16 %v1327, %v1320
    %v1447 = vpack.c.b16 %v1328, %v1321
    %v1448 = vpack.c.b16 %v1336, %v1329
    %v1449 = vpack.c.b16 %v1337, %v1330
    %v1450 = vpack.c.b16 %v1338, %v1331
    %v1451 = vpack.c.b16 %v1339, %v1332
    %v1452 = vpack.c.b16 %v1340, %v1333
    %v1453 = vpack.c.b16 %v1341, %v1334
    %v1454 = vpack.c.b16 %v1342, %v1335
    %v1455 = vpack.c.b16 %v1350, %v1343
    %v1456 = vpack.c.b16 %v1351, %v1344
    %v1457 = vpack.c.b16 %v1352, %v1345
    %v1458 = vpack.c.b16 %v1353, %v1346
    %v1459 = vpack.c.b16 %v1354, %v1347
    %v1460 = vpack.c.b16 %v1355, %v1348
    %v1461 = vpack.c.b16 %v1356, %v1349
    %v1568 = vsel %vm581, %v869, 0
    %1570 = vmatprep.subr.bf16.mxu0 %v1358
    %1571 = vmatpush1.bf16.msra.mxu0 %v1357
    %1572 = vmatprep.subr.bf16.mxu0 %v1365
    %1573 = vmatpush1.bf16.msra.mxu0 %v1364
    %1574 = vmatprep.subr.bf16.mxu0 %v1372
    %1575 = vmatpush1.bf16.msra.mxu0 %v1371
    %1576 = vmatprep.subr.bf16.mxu0 %v1379
    %1577 = vmatpush1.bf16.msra.mxu0 %v1378
    %1578 = vmatprep.subr.bf16.mxu0 %v1386
    %1579 = vmatpush1.bf16.msra.mxu0 %v1385
    %1580 = vmatprep.subr.bf16.mxu0 %v1393
    %1581 = vmatpush1.bf16.msra.mxu0 %v1392
    %1582 = vmatprep.subr.bf16.mxu0 %v1400
    %1583 = vmatpush1.bf16.msra.mxu0 %v1399
    %1584 = vmatprep.subr.bf16.mxu0 %v1407
    %1585 = vmatpush1.bf16.msra.mxu0 %v1406
    %1586 = vmatprep.subr.bf16.mxu0 %v1414
    %1587 = vmatpush1.bf16.msra.mxu0 %v1413
    %1588 = vmatprep.subr.bf16.mxu0 %v1421
    %1589 = vmatpush1.bf16.msra.mxu0 %v1420
    %1590 = vmatprep.subr.bf16.mxu0 %v1428
    %1591 = vmatpush1.bf16.msra.mxu0 %v1427
    %1592 = vmatprep.subr.bf16.mxu0 %v1435
    %1593 = vmatpush1.bf16.msra.mxu0 %v1434
    %1594 = vmatprep.subr.bf16.mxu0 %v1442
    %1595 = vmatpush1.bf16.msra.mxu0 %v1441
    %1596 = vmatprep.subr.bf16.mxu0 %v1449
    %1597 = vmatpush1.bf16.msra.mxu0 %v1448
    %1598 = vmatprep.subr.bf16.mxu0 %v1456
    %1599 = vmatpush1.bf16.msra.mxu0 %v1455
    %1600 = vmatprep.subr.bf16.mxu0 0
    %1601 = vmatpush1.bf16.msra.mxu0 0
    %1602 = vmatprep.mubr.bf16.mxu0 %v1568
    %1603 = vmatmul.mubr.bf16.gmra.mrb[0].mxu0 %v868
    %v1604 = vpop.f32.mrb[0].mxu0
    %v1605 = vadd.f32 %v995, %v1604
    %v1606 = vpop.f32.mrb[0].mxu0
    %v1607 = vadd.f32 %v999, %v1606
    %v1608 = vpop.f32.mrb[0].mxu0
    %v1609 = vpop.f32.mrb[0].mxu0
    %1610 = vdwg.mxu0
    %1611 = vmatprep.subr.bf16.mxu0 %v1360
    %1612 = vmatpush1.bf16.msra.mxu0 %v1359
    %1613 = vmatprep.subr.bf16.mxu0 %v1367
    %1614 = vmatpush1.bf16.msra.mxu0 %v1366
    %1615 = vmatprep.subr.bf16.mxu0 %v1374
    %1616 = vmatpush1.bf16.msra.mxu0 %v1373
    %1617 = vmatprep.subr.bf16.mxu0 %v1381
    %1618 = vmatpush1.bf16.msra.mxu0 %v1380
    %1619 = vmatprep.subr.bf16.mxu0 %v1388
    %1620 = vmatpush1.bf16.msra.mxu0 %v1387
    %1621 = vmatprep.subr.bf16.mxu0 %v1395
    %1622 = vmatpush1.bf16.msra.mxu0 %v1394
    %1623 = vmatprep.subr.bf16.mxu0 %v1402
    %1624 = vmatpush1.bf16.msra.mxu0 %v1401
    %1625 = vmatprep.subr.bf16.mxu0 %v1409
    %1626 = vmatpush1.bf16.msra.mxu0 %v1408
    %1627 = vmatprep.subr.bf16.mxu0 %v1416
    %1628 = vmatpush1.bf16.msra.mxu0 %v1415
    %1629 = vmatprep.subr.bf16.mxu0 %v1423
    %1630 = vmatpush1.bf16.msra.mxu0 %v1422
    %1631 = vmatprep.subr.bf16.mxu0 %v1430
    %1632 = vmatpush1.bf16.msra.mxu0 %v1429
    %1633 = vmatprep.subr.bf16.mxu0 %v1437
    %1634 = vmatpush1.bf16.msra.mxu0 %v1436
    %1635 = vmatprep.subr.bf16.mxu0 %v1444
    %1636 = vmatpush1.bf16.msra.mxu0 %v1443
    %1637 = vmatprep.subr.bf16.mxu0 %v1451
    %1638 = vmatpush1.bf16.msra.mxu0 %v1450
    %1639 = vmatprep.subr.bf16.mxu0 %v1458
    %1640 = vmatpush1.bf16.msra.mxu0 %v1457
    %1641 = vmatprep.subr.bf16.mxu0 0
    %1642 = vmatpush1.bf16.msra.mxu0 0
    %1643 = vmatprep.mubr.bf16.mxu0 %v1568
    %1644 = vmatmul.mubr.bf16.gmra.mrb[0].mxu0 %v868
    %v1645 = vpop.f32.mrb[0].mxu0
    %v1646 = vadd.f32 %v1003, %v1645
    %v1647 = vpop.f32.mrb[0].mxu0
    %v1648 = vadd.f32 %v1007, %v1647
    %v1649 = vpop.f32.mrb[0].mxu0
    %v1650 = vpop.f32.mrb[0].mxu0
    %1651 = vdwg.mxu0
    %1652 = vmatprep.subr.bf16.mxu0 %v1362
    %1653 = vmatpush1.bf16.msra.mxu0 %v1361
    %1654 = vmatprep.subr.bf16.mxu0 %v1369
    %1655 = vmatpush1.bf16.msra.mxu0 %v1368
    %1656 = vmatprep.subr.bf16.mxu0 %v1376
    %1657 = vmatpush1.bf16.msra.mxu0 %v1375
    %1658 = vmatprep.subr.bf16.mxu0 %v1383
    %1659 = vmatpush1.bf16.msra.mxu0 %v1382
    %1660 = vmatprep.subr.bf16.mxu0 %v1390
    %1661 = vmatpush1.bf16.msra.mxu0 %v1389
    %1662 = vmatprep.subr.bf16.mxu0 %v1397
    %1663 = vmatpush1.bf16.msra.mxu0 %v1396
    %1664 = vmatprep.subr.bf16.mxu0 %v1404
    %1665 = vmatpush1.bf16.msra.mxu0 %v1403
    %1666 = vmatprep.subr.bf16.mxu0 %v1411
    %1667 = vmatpush1.bf16.msra.mxu0 %v1410
    %1668 = vmatprep.subr.bf16.mxu0 %v1418
    %1669 = vmatpush1.bf16.msra.mxu0 %v1417
    %1670 = vmatprep.subr.bf16.mxu0 %v1425
    %1671 = vmatpush1.bf16.msra.mxu0 %v1424
    %1672 = vmatprep.subr.bf16.mxu0 %v1432
    %1673 = vmatpush1.bf16.msra.mxu0 %v1431
    %1674 = vmatprep.subr.bf16.mxu0 %v1439
    %1675 = vmatpush1.bf16.msra.mxu0 %v1438
    %1676 = vmatprep.subr.bf16.mxu0 %v1446
    %1677 = vmatpush1.bf16.msra.mxu0 %v1445
    %1678 = vmatprep.subr.bf16.mxu0 %v1453
    %1679 = vmatpush1.bf16.msra.mxu0 %v1452
    %1680 = vmatprep.subr.bf16.mxu0 %v1460
    %1681 = vmatpush1.bf16.msra.mxu0 %v1459
    %1682 = vmatprep.subr.bf16.mxu0 0
    %1683 = vmatpush1.bf16.msra.mxu0 0
    %1684 = vmatprep.mubr.bf16.mxu0 %v1568
    %1685 = vmatmul.mubr.bf16.gmra.mrb[0].mxu0 %v868
    %v1686 = vpop.f32.mrb[0].mxu0
    %v1687 = vadd.f32 %v1011, %v1686
    %v1688 = vpop.f32.mrb[0].mxu0
    %v1689 = vadd.f32 %v1015, %v1688
    %v1690 = vpop.f32.mrb[0].mxu0
    %v1691 = vpop.f32.mrb[0].mxu0
    %1692 = vdwg.mxu0
    %1693 = vmatprep.subr.bf16.mxu0 0
    %1694 = vmatpush1.bf16.msra.mxu0 %v1363
    %1695 = vmatprep.subr.bf16.mxu0 0
    %1696 = vmatpush1.bf16.msra.mxu0 %v1370
    %1697 = vmatprep.subr.bf16.mxu0 0
    %1698 = vmatpush1.bf16.msra.mxu0 %v1377
    %1699 = vmatprep.subr.bf16.mxu0 0
    %1700 = vmatpush1.bf16.msra.mxu0 %v1384
    %1701 = vmatprep.subr.bf16.mxu0 0
    %1702 = vmatpush1.bf16.msra.mxu0 %v1391
    %1703 = vmatprep.subr.bf16.mxu0 0
    %1704 = vmatpush1.bf16.msra.mxu0 %v1398
    %1705 = vmatprep.subr.bf16.mxu0 0
    %1706 = vmatpush1.bf16.msra.mxu0 %v1405
    %1707 = vmatprep.subr.bf16.mxu0 0
    %1708 = vmatpush1.bf16.msra.mxu0 %v1412
    %1709 = vmatprep.subr.bf16.mxu0 0
    %1710 = vmatpush1.bf16.msra.mxu0 %v1419
    %1711 = vmatprep.subr.bf16.mxu0 0
    %1712 = vmatpush1.bf16.msra.mxu0 %v1426
    %1713 = vmatprep.subr.bf16.mxu0 0
    %1714 = vmatpush1.bf16.msra.mxu0 %v1433
    %1715 = vmatprep.subr.bf16.mxu0 0
    %1716 = vmatpush1.bf16.msra.mxu0 %v1440
    %1717 = vmatprep.subr.bf16.mxu0 0
    %1718 = vmatpush1.bf16.msra.mxu0 %v1447
    %1719 = vmatprep.subr.bf16.mxu0 0
    %1720 = vmatpush1.bf16.msra.mxu0 %v1454
    %1721 = vmatprep.subr.bf16.mxu0 0
    %1722 = vmatpush1.bf16.msra.mxu0 %v1461
    %1723 = vmatprep.subr.bf16.mxu0 0
    %1724 = vmatpush1.bf16.msra.mxu0 0
    %1725 = vmatprep.mubr.bf16.mxu0 %v1568
    %1726 = vmatmul.mubr.bf16.gmra.mrb[0].mxu0 %v868
    %v1727 = vpop.f32.mrb[0].mxu0
    %v1728 = vadd.f32 %v1019, %v1727
    %v1729 = vpop.f32.mrb[0].mxu0
    %v1730 = vpop.f32.mrb[0].mxu0
    %v1731 = vpop.f32.mrb[0].mxu0
    %1732 = vdwg.mxu0
    %v1733 = vxor.u32 %v1605, 2147483648
    %v1734 = vxor.u32 %v1607, 2147483648
    %v1735 = vxor.u32 %v1646, 2147483648
    %v1736 = vxor.u32 %v1648, 2147483648
    %v1737 = vxor.u32 %v1687, 2147483648
    %v1738 = vxor.u32 %v1689, 2147483648
    %v1739 = vxor.u32 %v1728, 2147483648
    %v1740 = vmul.f32 %v1733, 1.442695
    %v1741 = vpow.pop %v1740
    %v1742 = vmul.f32 %v1734, 1.442695
    %v1743 = vpow.pop %v1742
    %v1744 = vmul.f32 %v1735, 1.442695
    %v1745 = vpow.pop %v1744
    %v1746 = vmul.f32 %v1736, 1.442695
    %v1747 = vpow.pop %v1746
    %v1748 = vmul.f32 %v1737, 1.442695
    %v1749 = vpow.pop %v1748
    %v1750 = vmul.f32 %v1738, 1.442695
    %v1751 = vpow.pop %v1750
    %v1752 = vmul.f32 %v1739, 1.442695
    %v1753 = vpow.pop %v1752
    %v1754 = vadd.f32 %v1741, 1.0
    %v1755 = vadd.f32 %v1743, 1.0
    %v1756 = vadd.f32 %v1745, 1.0
    %v1757 = vadd.f32 %v1747, 1.0
    %v1758 = vadd.f32 %v1749, 1.0
    %v1759 = vadd.f32 %v1751, 1.0
    %v1760 = vadd.f32 %v1753, 1.0
    %v1761 = vrcp.pop %v1754
    %v1762 = vmul.f32 1.0, %v1761
    %v1763 = vrcp.pop %v1755
    %v1764 = vmul.f32 1.0, %v1763
    %v1765 = vrcp.pop %v1756
    %v1766 = vmul.f32 1.0, %v1765
    %v1767 = vrcp.pop %v1757
    %v1768 = vmul.f32 1.0, %v1767
    %v1769 = vrcp.pop %v1758
    %v1770 = vmul.f32 1.0, %v1769
    %v1771 = vrcp.pop %v1759
    %v1772 = vmul.f32 1.0, %v1771
    %v1773 = vrcp.pop %v1760
    %v1774 = vmul.f32 1.0, %v1773
    %1775 = vst [vmem:[#allocation20] sm:$0xff] %v1762
    %1776 = vst [vmem:[#allocation20 + $0x8] sm:$0xff] %v1764
    %1777 = vst [vmem:[#allocation20 + $0x10] sm:$0xff] %v1766
    %1778 = vst [vmem:[#allocation20 + $0x18] sm:$0xff] %v1768
    %1779 = vst [vmem:[#allocation20 + $0x20] sm:$0xff] %v1770
    %1780 = vst [vmem:[#allocation20 + $0x28] sm:$0xff] %v1772
    %vm1781 = vcmask 130048
    %1782 = vst.msk [vmem:[#allocation20 + $0x30] sm:$0xff] %vm1781, %v1774
    // Predicated region
    $region90: #{tpu_custom_call.1} parent=1 // pred_check
      _
    $region91: #{tpu_custom_call.1} parent=1 // pred_check_branch
      %1784 = sbr.rel (0) target = $region93
    $region92: #{tpu_custom_call.1} parent=1 // pred_region
      %s1786 = ssub.s32 896, 896
      %1787 = vsyncadd [#allocation4], %s1786
      %s1789 = sshll.u32 [#allocation20], 4
      %s1790 = int_to_ptr.vmem [resolvable:$true] %s1789
      %1792 = dma.vmem_to_hbm [thread:$0]  %s1790, 896, %s11, [#allocation4]
    $region93: #{tpu_custom_call.1} parent=1 // pred_fallthru
      _
    // Predicated region
    $region94: #{tpu_custom_call.1} parent=1 // pred_check
      _
    $region95: #{tpu_custom_call.1} parent=1 // pred_check_branch
      %1794 = sbr.rel (0) target = $region97
    $region96: #{tpu_custom_call.1} parent=1 // pred_region
      %1795 = dma.done [#allocation4], 896
    $region97: #{tpu_custom_call.1} parent=1 // pred_fallthru
      _
    %1796 = vsyncpa [#allocation3], 1
    %1797 = vsyncpa [#allocation6], 1
    %1798 = vsyncpa [#allocation9], 1
    %1799 = vsyncpa [#allocation12], 1
    %1800 = vsyncpa [#allocation15], 1
    %1801 = vsyncpa [#allocation18], 1
    %1802 = vsyncpa [#allocation4], 1

</llo_original>
